<compile_context>
chip_gen: v5e
topology: v5e:2x2
jax: 0.10.0
libtpu: 0.0.40
codegen_flags: <defaults>
</compile_context>

<pallas_src>
import functools

import jax
import jax.numpy as jnp
from jax.experimental import pallas as pl
from jax.experimental.pallas import tpu as pltpu

MODEL_DIM = 64
NUM_HEADS = 4
HEAD_SIZE = MODEL_DIM // NUM_HEADS   # 16
FF_DIM = 4 * MODEL_DIM               # 256
LN_EPS = 1e-5
ROWS_TARGET = 512                    # target bb*T rows per grid step


def _layernorm(v, w, b):
    mean = jnp.mean(v, axis=-1, keepdims=True)
    var = jnp.mean((v - mean) ** 2, axis=-1, keepdims=True)
    return (v - mean) * jax.lax.rsqrt(var + LN_EPS) * w + b


def _softmax_last(a):
    m = jnp.max(a, axis=-1, keepdims=True)
    e = jnp.exp(a - m)
    # exact reciprocal: attention weights are checked to atol=1e-5.
    return e * pl.reciprocal(jnp.sum(e, axis=-1, keepdims=True), approx=False)


# --------------------------------------------------------------------------- #
# Main kernel: one grid step processes a block of `bb` batch elements
# (bb*T rows), with all attention math batched over the bb axis.
# --------------------------------------------------------------------------- #
def encoder_block_kernel(
    x_ref, pbias_ref,
    ln1w_ref, ln1b_ref, ln2w_ref, ln2b_ref,
    wc_ref,                       # fused (C, 3C) = [Wqc*scale | Wkc | Wv]
    wproj_ref,                    # (H, Dh, C)  (K-split projection weights)
    bproj_ref,
    w1_ref, b1_ref, w2_ref, b2_ref,
    y_ref, attw_ref,
    *, bb, seq_len, batch_total, compute_dtype,
):
    C, H, Dh, T = MODEL_DIM, NUM_HEADS, HEAD_SIZE, seq_len
    rows = bb * T

    x = x_ref[...].reshape(rows, C)                               # (bb*T, C)

    # Partial tail block (B % bb != 0): zero the garbage rows so everything
    # stays finite.  Their outputs are dropped on writeback by Pallas anyway.
    if batch_total % bb:
        valid_b = batch_total - pl.program_id(0) * bb
        bidx = jax.lax.broadcasted_iota(jnp.int32, (rows, 1), 0) // T
        x = jnp.where(bidx < valid_b, x, 0.0)

    # ---- ln1 + fused content QKV projection (one wide matmul) ---------------
    content = _layernorm(x, ln1w_ref[...], ln1b_ref[...])
    qkv = jnp.dot(content.astype(compute_dtype), wc_ref[...],
                  preferred_element_type=jnp.float32)             # (rows, 3C)

    # position bias loaded once per grid step (batch-invariant)
    pbias = pbias_ref[...]                                        # (H, T, T) f32

    # ---- disentangled attention: batched over bb, static H=4 loop -----------
    attn_out = jnp.zeros((rows, C), jnp.float32)
    att_flat = []
    for h in range(H):
        q_h = qkv[:, h * Dh:(h + 1) * Dh].reshape(bb, T, Dh)
        k_h = qkv[:, C + h * Dh:C + (h + 1) * Dh].reshape(bb, T, Dh)
        v_h = qkv[:, 2 * C + h * Dh:2 * C + (h + 1) * Dh].reshape(bb, T, Dh)

        # scale is pre-folded into Wqc; scores / softmax stay in f32.
        scores = jnp.einsum('bqd,bkd->bqk', q_h, k_h,
                            preferred_element_type=jnp.float32) + pbias[h]
        att = _softmax_last(scores)                               # (bb, T, T)
        att_flat.append(att.reshape(bb, T * T))                   # lane-dense slab

        out_h = jnp.einsum('bqk,bkd->bqd',
                           att.astype(compute_dtype),
                           v_h.astype(compute_dtype),
                           preferred_element_type=jnp.float32)    # (bb, T, Dh)
        # K-split output projection: head merge stays on the MXU accumulate
        # path -> no head/row concatenates.
        attn_out = attn_out + jnp.dot(
            out_h.reshape(rows, Dh).astype(compute_dtype), wproj_ref[h],
            preferred_element_type=jnp.float32)
    attn_out = attn_out + bproj_ref[...]

    # one lane-dense (bb, H*T*T) store of all attention weights
    attw_ref[...] = jnp.concatenate(att_flat, axis=-1)

    # ---- residual 1, ln2, feed-forward, residual 2 ---------------------------
    x1 = x + attn_out
    h2 = _layernorm(x1, ln2w_ref[...], ln2b_ref[...])
    ff1 = jnp.maximum(
        jnp.dot(h2.astype(compute_dtype), w1_ref[...],
                preferred_element_type=jnp.float32) + b1_ref[...], 0.0)
    ff2 = (jnp.dot(ff1.astype(compute_dtype), w2_ref[...],
                   preferred_element_type=jnp.float32) + b2_ref[...])

    y_ref[...] = (x1 + ff2).reshape(bb, T, C)


# --------------------------------------------------------------------------- #
# Wrapper
# --------------------------------------------------------------------------- #
def disentangled_encoder_block(x, pos_emb, params, *, compute_dtype=jnp.float32):
    # compute_dtype=jnp.bfloat16 is recommended on v6e/v7x (keep f32 on v5e and
    # whenever bit-tight agreement with an f32 reference is required).
    B, T, C = x.shape
    H, Dh = NUM_HEADS, HEAD_SIZE
    assert C == MODEL_DIM and pos_emb.shape == (T, C)
    scale = Dh ** (-0.5)

    # fuse per-head weights: (H, C, Dh) -> (C, H*Dh), head h on lanes [h*Dh,(h+1)*Dh)
    def fuse(w):
        return jnp.transpose(w, (1, 0, 2)).reshape(C, H * Dh)

    wc_fused = jnp.concatenate(
        [fuse(params["wqc"]) * scale, fuse(params["wkc"]), fuse(params["wv"])],
        axis=-1).astype(compute_dtype)                             # (C, 3C)
    wproj3 = params["wproj"].reshape(H, Dh, C).astype(compute_dtype)
    w1 = params["w1"].astype(compute_dtype)
    w2 = params["w2"].astype(compute_dtype)

    # ---- batch-invariant position bias: plain JAX (tiny, ~1 KiB output) -----
    qp = (pos_emb @ fuse(params["wqp"])).reshape(T, H, Dh)
    kp = (pos_emb @ fuse(params["wkp"])).reshape(T, H, Dh)
    pbias = (scale * jnp.einsum('qhd,khd->hqk', qp, kp)).astype(jnp.float32)

    # ---- batch block size: >=512 rows/step, grid >=2 when batch allows ------
    bb = min(B, max(1, ROWS_TARGET // T))
    if bb == B and B > 1 and (B // 2) * T >= 256:
        bb = pl.cdiv(B, 2)            # keep both v7x TensorCores busy
    if bb < B and bb % 8:
        bb = min(B, max(8, (bb // 8) * 8))   # sublane-aligned attw block
    grid = (pl.cdiv(B, bb),)

    full = lambda shape: pl.BlockSpec(shape, lambda b: (0,) * len(shape))

    in_specs = [
        pl.BlockSpec((bb, T, C), lambda b: (b, 0, 0)),             # x
        full((H, T, T)),                                           # position bias
        full((1, C)), full((1, C)), full((1, C)), full((1, C)),    # ln1 w/b, ln2 w/b
        full((C, 3 * C)),                                          # fused Wqc|Wkc|Wv
        full((H, Dh, C)), full((1, C)),                            # proj W (K-split), b
        full((C, FF_DIM)), full((1, FF_DIM)),                      # ff W1, b1
        full((FF_DIM, C)), full((1, C)),                           # ff W2, b2
    ]
    out_specs = [
        pl.BlockSpec((bb, T, C), lambda b: (b, 0, 0)),             # y
        pl.BlockSpec((bb, H * T * T), lambda b: (b, 0)),           # attw (lane-dense)
    ]
    out_shape = [
        jax.ShapeDtypeStruct((B, T, C), jnp.float32),
        jax.ShapeDtypeStruct((B, H * T * T), jnp.float32),
    ]

    kernel = functools.partial(encoder_block_kernel, bb=bb, seq_len=T,
                               batch_total=B, compute_dtype=compute_dtype)

    y, attw_flat = pl.pallas_call(
        kernel,
        grid=grid,
        in_specs=in_specs,
        out_specs=out_specs,
        out_shape=out_shape,
        compiler_params=pltpu.CompilerParams(
            dimension_semantics=("parallel",)),
    )(x, pbias,
      params["ln1_w"], params["ln1_b"], params["ln2_w"], params["ln2_b"],
      wc_fused, wproj3, params["bproj"],
      w1, params["b1"], w2, params["b2"])

    # (B, H*T*T) -> (H, B, T, T)
    attw = attw_flat.reshape(B, H, T, T).transpose(1, 0, 2, 3)
    return y, attw


# ----------------------------- pure-JAX reference ----------------------------
def reference(x, pos, p):
    def ln(v, w, b):
        m = jnp.mean(v, -1, keepdims=True)
        var = jnp.mean((v - m) ** 2, -1, keepdims=True)
        return (v - m) / jnp.sqrt(var + LN_EPS) * w + b

    content = ln(x, p["ln1_w"][0], p["ln1_b"][0])
    scale = HEAD_SIZE ** (-0.5)
    outs, attws = [], []
    for h in range(NUM_HEADS):
        qc = content @ p["wqc"][h]
        kc = content @ p["wkc"][h]
        qp = pos @ p["wqp"][h]
        kp = pos @ p["wkp"][h]
        v = content @ p["wv"][h]
        cc = jnp.einsum("btd,bsd->bts", qc, kc) * scale
        pp = (qp @ kp.T) * scale
        att = jax.nn.softmax(cc + pp[None], axis=-1)
        attws.append(att)
        outs.append(jnp.einsum("bts,bsd->btd", att, v))
    cat = jnp.concatenate(outs, -1)
    attn_out = cat @ p["wproj"] + p["bproj"][0]
    x1 = x + attn_out
    h2 = ln(x1, p["ln2_w"][0], p["ln2_b"][0])
    ff = jnp.maximum(h2 @ p["w1"] + p["b1"][0], 0.0) @ p["w2"] + p["b2"][0]
    return x1 + ff, jnp.stack(attws)


def make_params(key):
    ks = jax.random.split(key, 10)
    n = lambda k, shape: (0.02 * jax.random.normal(k, shape)).astype(jnp.float32)
    return {
        "ln1_w": jnp.ones((1, MODEL_DIM), jnp.float32),
        "ln1_b": jnp.zeros((1, MODEL_DIM), jnp.float32),
        "ln2_w": jnp.ones((1, MODEL_DIM), jnp.float32),
        "ln2_b": jnp.zeros((1, MODEL_DIM), jnp.float32),
        # per-head linear weights, pre-transposed to (in, out) = (C, head_size)
        "wqc": n(ks[0], (NUM_HEADS, MODEL_DIM, HEAD_SIZE)),
        "wkc": n(ks[1], (NUM_HEADS, MODEL_DIM, HEAD_SIZE)),
        "wqp": n(ks[2], (NUM_HEADS, MODEL_DIM, HEAD_SIZE)),
        "wkp": n(ks[3], (NUM_HEADS, MODEL_DIM, HEAD_SIZE)),
        "wv":  n(ks[4], (NUM_HEADS, MODEL_DIM, HEAD_SIZE)),
        "wproj": n(ks[5], (MODEL_DIM, MODEL_DIM)),
        "bproj": n(ks[6], (1, MODEL_DIM)),
        "w1": n(ks[7], (MODEL_DIM, FF_DIM)),
        "b1": jnp.zeros((1, FF_DIM), jnp.float32),
        "w2": n(ks[8], (FF_DIM, MODEL_DIM)),
        "b2": jnp.zeros((1, MODEL_DIM), jnp.float32),
    }


if __name__ == "__main__":
    key = jax.random.PRNGKey(0)
    k_x, k_p, k_w = jax.random.split(key, 3)

    B, T = 2, 8
    x = jax.random.normal(k_x, (B, T, MODEL_DIM), jnp.float32)
    pos_emb = jax.random.normal(k_p, (T, MODEL_DIM), jnp.float32)
    params = make_params(k_w)

    y, attw = disentangled_encoder_block(x, pos_emb, params)
    jax.block_until_ready((y, attw))

    y_ref, attw_ref = reference(x, pos_emb, params)
    assert y.shape == (B, T, MODEL_DIM)
    assert attw.shape == (NUM_HEADS, B, T, T)
    assert jnp.allclose(y, y_ref, atol=1e-4, rtol=1e-4)
    assert jnp.allclose(attw, attw_ref, atol=1e-5, rtol=1e-4)

    print("KERNEL_OK")
</pallas_src>

<mosaic_0001>
module attributes {stable_mosaic.version = 11 : i64} {
  func.func @encoder_block_kernel(%arg0: i32, %arg1: memref<2x8x64xf32, #tpu.memory_space<vmem>>, %arg2: memref<4x8x8xf32, #tpu.memory_space<vmem>>, %arg3: memref<1x64xf32, #tpu.memory_space<vmem>>, %arg4: memref<1x64xf32, #tpu.memory_space<vmem>>, %arg5: memref<1x64xf32, #tpu.memory_space<vmem>>, %arg6: memref<1x64xf32, #tpu.memory_space<vmem>>, %arg7: memref<64x192xf32, #tpu.memory_space<vmem>>, %arg8: memref<4x16x64xf32, #tpu.memory_space<vmem>>, %arg9: memref<1x64xf32, #tpu.memory_space<vmem>>, %arg10: memref<64x256xf32, #tpu.memory_space<vmem>>, %arg11: memref<1x256xf32, #tpu.memory_space<vmem>>, %arg12: memref<256x64xf32, #tpu.memory_space<vmem>>, %arg13: memref<1x64xf32, #tpu.memory_space<vmem>>, %arg14: memref<2x8x64xf32, #tpu.memory_space<vmem>>, %arg15: memref<2x256xf32, #tpu.memory_space<vmem>>) attributes {dimension_semantics = [#tpu.dimension_semantics<parallel>], iteration_bounds = array<i64: 1>, scalar_prefetch = 0 : i64, scratch_operands = 0 : i64, tpu.core_type = #tpu.core_type<tc>, window_params = [{transform_indices = @transform_0, window_bounds = array<i64: 2, 8, 64>}, {pipeline_mode = #tpu.pipeline_mode<synchronous>, transform_indices = @transform_1, window_bounds = array<i64: 4, 8, 8>}, {pipeline_mode = #tpu.pipeline_mode<synchronous>, transform_indices = @transform_2, window_bounds = array<i64: 1, 64>}, {pipeline_mode = #tpu.pipeline_mode<synchronous>, transform_indices = @transform_3, window_bounds = array<i64: 1, 64>}, {pipeline_mode = #tpu.pipeline_mode<synchronous>, transform_indices = @transform_4, window_bounds = array<i64: 1, 64>}, {pipeline_mode = #tpu.pipeline_mode<synchronous>, transform_indices = @transform_5, window_bounds = array<i64: 1, 64>}, {pipeline_mode = #tpu.pipeline_mode<synchronous>, transform_indices = @transform_6, window_bounds = array<i64: 64, 192>}, {pipeline_mode = #tpu.pipeline_mode<synchronous>, transform_indices = @transform_7, window_bounds = array<i64: 4, 16, 64>}, {pipeline_mode = #tpu.pipeline_mode<synchronous>, transform_indices = @transform_8, window_bounds = array<i64: 1, 64>}, {pipeline_mode = #tpu.pipeline_mode<synchronous>, transform_indices = @transform_9, window_bounds = array<i64: 64, 256>}, {pipeline_mode = #tpu.pipeline_mode<synchronous>, transform_indices = @transform_10, window_bounds = array<i64: 1, 256>}, {pipeline_mode = #tpu.pipeline_mode<synchronous>, transform_indices = @transform_11, window_bounds = array<i64: 256, 64>}, {pipeline_mode = #tpu.pipeline_mode<synchronous>, transform_indices = @transform_12, window_bounds = array<i64: 1, 64>}, {transform_indices = @transform_13, window_bounds = array<i64: 2, 8, 64>}, {transform_indices = @transform_14, window_bounds = array<i64: 2, 256>}]} {
    %c0 = arith.constant 0 : index
    %c0_0 = arith.constant 0 : index
    %c0_1 = arith.constant 0 : index
    %0 = vector.load %arg1[%c0, %c0_0, %c0_1] : memref<2x8x64xf32, #tpu.memory_space<vmem>>, vector<2x8x64xf32>
    %1 = vector.shape_cast %0 : vector<2x8x64xf32> to vector<16x64xf32>
    %c0_2 = arith.constant 0 : index
    %c0_3 = arith.constant 0 : index
    %2 = vector.load %arg3[%c0_2, %c0_3] : memref<1x64xf32, #tpu.memory_space<vmem>>, vector<1x64xf32>
    %c0_4 = arith.constant 0 : index
    %c0_5 = arith.constant 0 : index
    %3 = vector.load %arg4[%c0_4, %c0_5] : memref<1x64xf32, #tpu.memory_space<vmem>>, vector<1x64xf32>
    %cst = arith.constant dense<0.000000e+00> : vector<16xf32>
    %4 = vector.multi_reduction <add>, %1, %cst [1] : vector<16x64xf32> to vector<16xf32>
    %5 = vector.shape_cast %4 : vector<16xf32> to vector<16x1xf32>
    %cst_6 = arith.constant 6.400000e+01 : f32
    %6 = vector.broadcast %cst_6 : f32 to vector<16x1xf32>
    %7 = arith.divf %5, %6 : vector<16x1xf32>
    %8 = vector.broadcast %7 : vector<16x1xf32> to vector<16x64xf32>
    %9 = arith.subf %1, %8 : vector<16x64xf32>
    %10 = arith.mulf %9, %9 : vector<16x64xf32>
    %cst_7 = arith.constant dense<0.000000e+00> : vector<16xf32>
    %11 = vector.multi_reduction <add>, %10, %cst_7 [1] : vector<16x64xf32> to vector<16xf32>
    %12 = vector.shape_cast %11 : vector<16xf32> to vector<16x1xf32>
    %cst_8 = arith.constant 6.400000e+01 : f32
    %13 = vector.broadcast %cst_8 : f32 to vector<16x1xf32>
    %14 = arith.divf %12, %13 : vector<16x1xf32>
    %15 = vector.broadcast %7 : vector<16x1xf32> to vector<16x64xf32>
    %16 = arith.subf %1, %15 : vector<16x64xf32>
    %cst_9 = arith.constant 9.99999974E-6 : f32
    %17 = vector.broadcast %cst_9 : f32 to vector<16x1xf32>
    %18 = arith.addf %14, %17 : vector<16x1xf32>
    %19 = math.rsqrt %18 : vector<16x1xf32>
    %20 = vector.broadcast %19 : vector<16x1xf32> to vector<16x64xf32>
    %21 = arith.mulf %16, %20 : vector<16x64xf32>
    %22 = vector.broadcast %2 : vector<1x64xf32> to vector<16x64xf32>
    %23 = arith.mulf %21, %22 : vector<16x64xf32>
    %24 = vector.broadcast %3 : vector<1x64xf32> to vector<16x64xf32>
    %25 = arith.addf %23, %24 : vector<16x64xf32>
    %c0_10 = arith.constant 0 : index
    %c0_11 = arith.constant 0 : index
    %26 = vector.load %arg7[%c0_10, %c0_11] : memref<64x192xf32, #tpu.memory_space<vmem>>, vector<64x192xf32>
    %cst_12 = arith.constant dense<0.000000e+00> : vector<16x192xf32>
    %27 = tpu.matmul %25, %26, %cst_12 {dimension_numbers = #tpu.dot_dimension_numbers<[1], [0], [0], [1], [0, 0, 1, 1], [], []>} : vector<16x64xf32>, vector<64x192xf32>, vector<16x192xf32> -> vector<16x192xf32>
    %c0_13 = arith.constant 0 : index
    %c0_14 = arith.constant 0 : index
    %c0_15 = arith.constant 0 : index
    %28 = vector.load %arg2[%c0_13, %c0_14, %c0_15] : memref<4x8x8xf32, #tpu.memory_space<vmem>>, vector<4x8x8xf32>
    %cst_16 = arith.constant 0.000000e+00 : f32
    %29 = vector.broadcast %cst_16 : f32 to vector<16x64xf32>
    %30 = vector.extract_strided_slice %27 {offsets = [0, 0], sizes = [16, 16], strides = [1, 1]} : vector<16x192xf32> to vector<16x16xf32>
    %31 = vector.shape_cast %30 : vector<16x16xf32> to vector<2x8x16xf32>
    %32 = vector.extract_strided_slice %27 {offsets = [0, 64], sizes = [16, 16], strides = [1, 1]} : vector<16x192xf32> to vector<16x16xf32>
    %33 = vector.shape_cast %32 : vector<16x16xf32> to vector<2x8x16xf32>
    %34 = vector.extract_strided_slice %27 {offsets = [0, 128], sizes = [16, 16], strides = [1, 1]} : vector<16x192xf32> to vector<16x16xf32>
    %35 = vector.shape_cast %34 : vector<16x16xf32> to vector<2x8x16xf32>
    "tpu.trace_start"() <{level = 10 : i32, message = "bqd,bkd->bqk"}> : () -> ()
    %cst_17 = arith.constant dense<0.000000e+00> : vector<2x8x8xf32>
    %36 = tpu.matmul %31, %33, %cst_17 {dimension_numbers = #tpu.dot_dimension_numbers<[2], [2], [1], [1], [0, 0, 0, 1, 1, 1], [0], [0]>} : vector<2x8x16xf32>, vector<2x8x16xf32>, vector<2x8x8xf32> -> vector<2x8x8xf32>
    "tpu.trace_stop"() : () -> ()
    %37 = vector.extract_strided_slice %28 {offsets = [0, 0, 0], sizes = [1, 8, 8], strides = [1, 1, 1]} : vector<4x8x8xf32> to vector<1x8x8xf32>
    %38 = vector.shape_cast %37 : vector<1x8x8xf32> to vector<8x8xf32>
    %39 = vector.shape_cast %38 : vector<8x8xf32> to vector<1x8x8xf32>
    %40 = vector.broadcast %39 : vector<1x8x8xf32> to vector<2x8x8xf32>
    %41 = arith.addf %36, %40 : vector<2x8x8xf32>
    %cst_18 = arith.constant dense<0xFF800000> : vector<2x8xf32>
    %42 = vector.multi_reduction <maximumf>, %41, %cst_18 [2] : vector<2x8x8xf32> to vector<2x8xf32>
    %43 = vector.shape_cast %42 : vector<2x8xf32> to vector<2x8x1xf32>
    %44 = vector.broadcast %43 : vector<2x8x1xf32> to vector<2x8x8xf32>
    %45 = arith.subf %41, %44 : vector<2x8x8xf32>
    %46 = math.exp %45 : vector<2x8x8xf32>
    %cst_19 = arith.constant dense<0.000000e+00> : vector<2x8xf32>
    %47 = vector.multi_reduction <add>, %46, %cst_19 [2] : vector<2x8x8xf32> to vector<2x8xf32>
    %48 = vector.shape_cast %47 : vector<2x8xf32> to vector<2x8x1xf32>
    %49 = tpu.reciprocal %48 : vector<2x8x1xf32> -> vector<2x8x1xf32>
    %50 = vector.broadcast %49 : vector<2x8x1xf32> to vector<2x8x8xf32>
    %51 = arith.mulf %46, %50 : vector<2x8x8xf32>
    %52 = vector.shape_cast %51 : vector<2x8x8xf32> to vector<2x64xf32>
    "tpu.trace_start"() <{level = 10 : i32, message = "bqk,bkd->bqd"}> : () -> ()
    %cst_20 = arith.constant dense<0.000000e+00> : vector<2x8x16xf32>
    %53 = tpu.matmul %51, %35, %cst_20 {dimension_numbers = #tpu.dot_dimension_numbers<[2], [1], [1], [2], [0, 0, 0, 1, 1, 2], [0], [0]>} : vector<2x8x8xf32>, vector<2x8x16xf32>, vector<2x8x16xf32> -> vector<2x8x16xf32>
    "tpu.trace_stop"() : () -> ()
    %54 = vector.shape_cast %53 : vector<2x8x16xf32> to vector<16x16xf32>
    %c0_21 = arith.constant 0 : index
    %c0_22 = arith.constant 0 : index
    %c0_23 = arith.constant 0 : index
    %55 = vector.load %arg8[%c0_21, %c0_22, %c0_23] : memref<4x16x64xf32, #tpu.memory_space<vmem>>, vector<1x16x64xf32>
    %56 = vector.shape_cast %55 : vector<1x16x64xf32> to vector<16x64xf32>
    %cst_24 = arith.constant dense<0.000000e+00> : vector<16x64xf32>
    %57 = tpu.matmul %54, %56, %cst_24 {dimension_numbers = #tpu.dot_dimension_numbers<[1], [0], [0], [1], [0, 0, 1, 1], [], []>} : vector<16x16xf32>, vector<16x64xf32>, vector<16x64xf32> -> vector<16x64xf32>
    %58 = arith.addf %29, %57 : vector<16x64xf32>
    %59 = vector.extract_strided_slice %27 {offsets = [0, 16], sizes = [16, 16], strides = [1, 1]} : vector<16x192xf32> to vector<16x16xf32>
    %60 = vector.shape_cast %59 : vector<16x16xf32> to vector<2x8x16xf32>
    %61 = vector.extract_strided_slice %27 {offsets = [0, 80], sizes = [16, 16], strides = [1, 1]} : vector<16x192xf32> to vector<16x16xf32>
    %62 = vector.shape_cast %61 : vector<16x16xf32> to vector<2x8x16xf32>
    %63 = vector.extract_strided_slice %27 {offsets = [0, 144], sizes = [16, 16], strides = [1, 1]} : vector<16x192xf32> to vector<16x16xf32>
    %64 = vector.shape_cast %63 : vector<16x16xf32> to vector<2x8x16xf32>
    "tpu.trace_start"() <{level = 10 : i32, message = "bqd,bkd->bqk"}> : () -> ()
    %cst_25 = arith.constant dense<0.000000e+00> : vector<2x8x8xf32>
    %65 = tpu.matmul %60, %62, %cst_25 {dimension_numbers = #tpu.dot_dimension_numbers<[2], [2], [1], [1], [0, 0, 0, 1, 1, 1], [0], [0]>} : vector<2x8x16xf32>, vector<2x8x16xf32>, vector<2x8x8xf32> -> vector<2x8x8xf32>
    "tpu.trace_stop"() : () -> ()
    %66 = vector.extract_strided_slice %28 {offsets = [1, 0, 0], sizes = [1, 8, 8], strides = [1, 1, 1]} : vector<4x8x8xf32> to vector<1x8x8xf32>
    %67 = vector.shape_cast %66 : vector<1x8x8xf32> to vector<8x8xf32>
    %68 = vector.shape_cast %67 : vector<8x8xf32> to vector<1x8x8xf32>
    %69 = vector.broadcast %68 : vector<1x8x8xf32> to vector<2x8x8xf32>
    %70 = arith.addf %65, %69 : vector<2x8x8xf32>
    %cst_26 = arith.constant dense<0xFF800000> : vector<2x8xf32>
    %71 = vector.multi_reduction <maximumf>, %70, %cst_26 [2] : vector<2x8x8xf32> to vector<2x8xf32>
    %72 = vector.shape_cast %71 : vector<2x8xf32> to vector<2x8x1xf32>
    %73 = vector.broadcast %72 : vector<2x8x1xf32> to vector<2x8x8xf32>
    %74 = arith.subf %70, %73 : vector<2x8x8xf32>
    %75 = math.exp %74 : vector<2x8x8xf32>
    %cst_27 = arith.constant dense<0.000000e+00> : vector<2x8xf32>
    %76 = vector.multi_reduction <add>, %75, %cst_27 [2] : vector<2x8x8xf32> to vector<2x8xf32>
    %77 = vector.shape_cast %76 : vector<2x8xf32> to vector<2x8x1xf32>
    %78 = tpu.reciprocal %77 : vector<2x8x1xf32> -> vector<2x8x1xf32>
    %79 = vector.broadcast %78 : vector<2x8x1xf32> to vector<2x8x8xf32>
    %80 = arith.mulf %75, %79 : vector<2x8x8xf32>
    %81 = vector.shape_cast %80 : vector<2x8x8xf32> to vector<2x64xf32>
    "tpu.trace_start"() <{level = 10 : i32, message = "bqk,bkd->bqd"}> : () -> ()
    %cst_28 = arith.constant dense<0.000000e+00> : vector<2x8x16xf32>
    %82 = tpu.matmul %80, %64, %cst_28 {dimension_numbers = #tpu.dot_dimension_numbers<[2], [1], [1], [2], [0, 0, 0, 1, 1, 2], [0], [0]>} : vector<2x8x8xf32>, vector<2x8x16xf32>, vector<2x8x16xf32> -> vector<2x8x16xf32>
    "tpu.trace_stop"() : () -> ()
    %83 = vector.shape_cast %82 : vector<2x8x16xf32> to vector<16x16xf32>
    %c1 = arith.constant 1 : index
    %c0_29 = arith.constant 0 : index
    %c0_30 = arith.constant 0 : index
    %84 = vector.load %arg8[%c1, %c0_29, %c0_30] : memref<4x16x64xf32, #tpu.memory_space<vmem>>, vector<1x16x64xf32>
    %85 = vector.shape_cast %84 : vector<1x16x64xf32> to vector<16x64xf32>
    %cst_31 = arith.constant dense<0.000000e+00> : vector<16x64xf32>
    %86 = tpu.matmul %83, %85, %cst_31 {dimension_numbers = #tpu.dot_dimension_numbers<[1], [0], [0], [1], [0, 0, 1, 1], [], []>} : vector<16x16xf32>, vector<16x64xf32>, vector<16x64xf32> -> vector<16x64xf32>
    %87 = arith.addf %58, %86 : vector<16x64xf32>
    %88 = vector.extract_strided_slice %27 {offsets = [0, 32], sizes = [16, 16], strides = [1, 1]} : vector<16x192xf32> to vector<16x16xf32>
    %89 = vector.shape_cast %88 : vector<16x16xf32> to vector<2x8x16xf32>
    %90 = vector.extract_strided_slice %27 {offsets = [0, 96], sizes = [16, 16], strides = [1, 1]} : vector<16x192xf32> to vector<16x16xf32>
    %91 = vector.shape_cast %90 : vector<16x16xf32> to vector<2x8x16xf32>
    %92 = vector.extract_strided_slice %27 {offsets = [0, 160], sizes = [16, 16], strides = [1, 1]} : vector<16x192xf32> to vector<16x16xf32>
    %93 = vector.shape_cast %92 : vector<16x16xf32> to vector<2x8x16xf32>
    "tpu.trace_start"() <{level = 10 : i32, message = "bqd,bkd->bqk"}> : () -> ()
    %cst_32 = arith.constant dense<0.000000e+00> : vector<2x8x8xf32>
    %94 = tpu.matmul %89, %91, %cst_32 {dimension_numbers = #tpu.dot_dimension_numbers<[2], [2], [1], [1], [0, 0, 0, 1, 1, 1], [0], [0]>} : vector<2x8x16xf32>, vector<2x8x16xf32>, vector<2x8x8xf32> -> vector<2x8x8xf32>
    "tpu.trace_stop"() : () -> ()
    %95 = vector.extract_strided_slice %28 {offsets = [2, 0, 0], sizes = [1, 8, 8], strides = [1, 1, 1]} : vector<4x8x8xf32> to vector<1x8x8xf32>
    %96 = vector.shape_cast %95 : vector<1x8x8xf32> to vector<8x8xf32>
    %97 = vector.shape_cast %96 : vector<8x8xf32> to vector<1x8x8xf32>
    %98 = vector.broadcast %97 : vector<1x8x8xf32> to vector<2x8x8xf32>
    %99 = arith.addf %94, %98 : vector<2x8x8xf32>
    %cst_33 = arith.constant dense<0xFF800000> : vector<2x8xf32>
    %100 = vector.multi_reduction <maximumf>, %99, %cst_33 [2] : vector<2x8x8xf32> to vector<2x8xf32>
    %101 = vector.shape_cast %100 : vector<2x8xf32> to vector<2x8x1xf32>
    %102 = vector.broadcast %101 : vector<2x8x1xf32> to vector<2x8x8xf32>
    %103 = arith.subf %99, %102 : vector<2x8x8xf32>
    %104 = math.exp %103 : vector<2x8x8xf32>
    %cst_34 = arith.constant dense<0.000000e+00> : vector<2x8xf32>
    %105 = vector.multi_reduction <add>, %104, %cst_34 [2] : vector<2x8x8xf32> to vector<2x8xf32>
    %106 = vector.shape_cast %105 : vector<2x8xf32> to vector<2x8x1xf32>
    %107 = tpu.reciprocal %106 : vector<2x8x1xf32> -> vector<2x8x1xf32>
    %108 = vector.broadcast %107 : vector<2x8x1xf32> to vector<2x8x8xf32>
    %109 = arith.mulf %104, %108 : vector<2x8x8xf32>
    %110 = vector.shape_cast %109 : vector<2x8x8xf32> to vector<2x64xf32>
    "tpu.trace_start"() <{level = 10 : i32, message = "bqk,bkd->bqd"}> : () -> ()
    %cst_35 = arith.constant dense<0.000000e+00> : vector<2x8x16xf32>
    %111 = tpu.matmul %109, %93, %cst_35 {dimension_numbers = #tpu.dot_dimension_numbers<[2], [1], [1], [2], [0, 0, 0, 1, 1, 2], [0], [0]>} : vector<2x8x8xf32>, vector<2x8x16xf32>, vector<2x8x16xf32> -> vector<2x8x16xf32>
    "tpu.trace_stop"() : () -> ()
    %112 = vector.shape_cast %111 : vector<2x8x16xf32> to vector<16x16xf32>
    %c2 = arith.constant 2 : index
    %c0_36 = arith.constant 0 : index
    %c0_37 = arith.constant 0 : index
    %113 = vector.load %arg8[%c2, %c0_36, %c0_37] : memref<4x16x64xf32, #tpu.memory_space<vmem>>, vector<1x16x64xf32>
    %114 = vector.shape_cast %113 : vector<1x16x64xf32> to vector<16x64xf32>
    %cst_38 = arith.constant dense<0.000000e+00> : vector<16x64xf32>
    %115 = tpu.matmul %112, %114, %cst_38 {dimension_numbers = #tpu.dot_dimension_numbers<[1], [0], [0], [1], [0, 0, 1, 1], [], []>} : vector<16x16xf32>, vector<16x64xf32>, vector<16x64xf32> -> vector<16x64xf32>
    %116 = arith.addf %87, %115 : vector<16x64xf32>
    %117 = vector.extract_strided_slice %27 {offsets = [0, 48], sizes = [16, 16], strides = [1, 1]} : vector<16x192xf32> to vector<16x16xf32>
    %118 = vector.shape_cast %117 : vector<16x16xf32> to vector<2x8x16xf32>
    %119 = vector.extract_strided_slice %27 {offsets = [0, 112], sizes = [16, 16], strides = [1, 1]} : vector<16x192xf32> to vector<16x16xf32>
    %120 = vector.shape_cast %119 : vector<16x16xf32> to vector<2x8x16xf32>
    %121 = vector.extract_strided_slice %27 {offsets = [0, 176], sizes = [16, 16], strides = [1, 1]} : vector<16x192xf32> to vector<16x16xf32>
    %122 = vector.shape_cast %121 : vector<16x16xf32> to vector<2x8x16xf32>
    "tpu.trace_start"() <{level = 10 : i32, message = "bqd,bkd->bqk"}> : () -> ()
    %cst_39 = arith.constant dense<0.000000e+00> : vector<2x8x8xf32>
    %123 = tpu.matmul %118, %120, %cst_39 {dimension_numbers = #tpu.dot_dimension_numbers<[2], [2], [1], [1], [0, 0, 0, 1, 1, 1], [0], [0]>} : vector<2x8x16xf32>, vector<2x8x16xf32>, vector<2x8x8xf32> -> vector<2x8x8xf32>
    "tpu.trace_stop"() : () -> ()
    %124 = vector.extract_strided_slice %28 {offsets = [3, 0, 0], sizes = [1, 8, 8], strides = [1, 1, 1]} : vector<4x8x8xf32> to vector<1x8x8xf32>
    %125 = vector.shape_cast %124 : vector<1x8x8xf32> to vector<8x8xf32>
    %126 = vector.shape_cast %125 : vector<8x8xf32> to vector<1x8x8xf32>
    %127 = vector.broadcast %126 : vector<1x8x8xf32> to vector<2x8x8xf32>
    %128 = arith.addf %123, %127 : vector<2x8x8xf32>
    %cst_40 = arith.constant dense<0xFF800000> : vector<2x8xf32>
    %129 = vector.multi_reduction <maximumf>, %128, %cst_40 [2] : vector<2x8x8xf32> to vector<2x8xf32>
    %130 = vector.shape_cast %129 : vector<2x8xf32> to vector<2x8x1xf32>
    %131 = vector.broadcast %130 : vector<2x8x1xf32> to vector<2x8x8xf32>
    %132 = arith.subf %128, %131 : vector<2x8x8xf32>
    %133 = math.exp %132 : vector<2x8x8xf32>
    %cst_41 = arith.constant dense<0.000000e+00> : vector<2x8xf32>
    %134 = vector.multi_reduction <add>, %133, %cst_41 [2] : vector<2x8x8xf32> to vector<2x8xf32>
    %135 = vector.shape_cast %134 : vector<2x8xf32> to vector<2x8x1xf32>
    %136 = tpu.reciprocal %135 : vector<2x8x1xf32> -> vector<2x8x1xf32>
    %137 = vector.broadcast %136 : vector<2x8x1xf32> to vector<2x8x8xf32>
    %138 = arith.mulf %133, %137 : vector<2x8x8xf32>
    %139 = vector.shape_cast %138 : vector<2x8x8xf32> to vector<2x64xf32>
    "tpu.trace_start"() <{level = 10 : i32, message = "bqk,bkd->bqd"}> : () -> ()
    %cst_42 = arith.constant dense<0.000000e+00> : vector<2x8x16xf32>
    %140 = tpu.matmul %138, %122, %cst_42 {dimension_numbers = #tpu.dot_dimension_numbers<[2], [1], [1], [2], [0, 0, 0, 1, 1, 2], [0], [0]>} : vector<2x8x8xf32>, vector<2x8x16xf32>, vector<2x8x16xf32> -> vector<2x8x16xf32>
    "tpu.trace_stop"() : () -> ()
    %141 = vector.shape_cast %140 : vector<2x8x16xf32> to vector<16x16xf32>
    %c3 = arith.constant 3 : index
    %c0_43 = arith.constant 0 : index
    %c0_44 = arith.constant 0 : index
    %142 = vector.load %arg8[%c3, %c0_43, %c0_44] : memref<4x16x64xf32, #tpu.memory_space<vmem>>, vector<1x16x64xf32>
    %143 = vector.shape_cast %142 : vector<1x16x64xf32> to vector<16x64xf32>
    %cst_45 = arith.constant dense<0.000000e+00> : vector<16x64xf32>
    %144 = tpu.matmul %141, %143, %cst_45 {dimension_numbers = #tpu.dot_dimension_numbers<[1], [0], [0], [1], [0, 0, 1, 1], [], []>} : vector<16x16xf32>, vector<16x64xf32>, vector<16x64xf32> -> vector<16x64xf32>
    %145 = arith.addf %116, %144 : vector<16x64xf32>
    %c0_46 = arith.constant 0 : index
    %c0_47 = arith.constant 0 : index
    %146 = vector.load %arg9[%c0_46, %c0_47] : memref<1x64xf32, #tpu.memory_space<vmem>>, vector<1x64xf32>
    %147 = vector.broadcast %146 : vector<1x64xf32> to vector<16x64xf32>
    %148 = arith.addf %145, %147 : vector<16x64xf32>
    %149 = tpu.concatenate %52, %81, %110, %139 in 1 : vector<2x64xf32>, vector<2x64xf32>, vector<2x64xf32>, vector<2x64xf32> -> vector<2x256xf32>
    %c0_48 = arith.constant 0 : index
    %c0_49 = arith.constant 0 : index
    %150 = vector.load %arg15[%c0_48, %c0_49] : memref<2x256xf32, #tpu.memory_space<vmem>>, vector<2x256xf32>
    tpu.vector_store %arg15[%c0_48, %c0_49], %149 {strides = array<i32>} : memref<2x256xf32, #tpu.memory_space<vmem>>, vector<2x256xf32>,
    %151 = arith.addf %1, %148 : vector<16x64xf32>
    %c0_50 = arith.constant 0 : index
    %c0_51 = arith.constant 0 : index
    %152 = vector.load %arg5[%c0_50, %c0_51] : memref<1x64xf32, #tpu.memory_space<vmem>>, vector<1x64xf32>
    %c0_52 = arith.constant 0 : index
    %c0_53 = arith.constant 0 : index
    %153 = vector.load %arg6[%c0_52, %c0_53] : memref<1x64xf32, #tpu.memory_space<vmem>>, vector<1x64xf32>
    %cst_54 = arith.constant dense<0.000000e+00> : vector<16xf32>
    %154 = vector.multi_reduction <add>, %151, %cst_54 [1] : vector<16x64xf32> to vector<16xf32>
    %155 = vector.shape_cast %154 : vector<16xf32> to vector<16x1xf32>
    %cst_55 = arith.constant 6.400000e+01 : f32
    %156 = vector.broadcast %cst_55 : f32 to vector<16x1xf32>
    %157 = arith.divf %155, %156 : vector<16x1xf32>
    %158 = vector.broadcast %157 : vector<16x1xf32> to vector<16x64xf32>
    %159 = arith.subf %151, %158 : vector<16x64xf32>
    %160 = arith.mulf %159, %159 : vector<16x64xf32>
    %cst_56 = arith.constant dense<0.000000e+00> : vector<16xf32>
    %161 = vector.multi_reduction <add>, %160, %cst_56 [1] : vector<16x64xf32> to vector<16xf32>
    %162 = vector.shape_cast %161 : vector<16xf32> to vector<16x1xf32>
    %cst_57 = arith.constant 6.400000e+01 : f32
    %163 = vector.broadcast %cst_57 : f32 to vector<16x1xf32>
    %164 = arith.divf %162, %163 : vector<16x1xf32>
    %165 = vector.broadcast %157 : vector<16x1xf32> to vector<16x64xf32>
    %166 = arith.subf %151, %165 : vector<16x64xf32>
    %cst_58 = arith.constant 9.99999974E-6 : f32
    %167 = vector.broadcast %cst_58 : f32 to vector<16x1xf32>
    %168 = arith.addf %164, %167 : vector<16x1xf32>
    %169 = math.rsqrt %168 : vector<16x1xf32>
    %170 = vector.broadcast %169 : vector<16x1xf32> to vector<16x64xf32>
    %171 = arith.mulf %166, %170 : vector<16x64xf32>
    %172 = vector.broadcast %152 : vector<1x64xf32> to vector<16x64xf32>
    %173 = arith.mulf %171, %172 : vector<16x64xf32>
    %174 = vector.broadcast %153 : vector<1x64xf32> to vector<16x64xf32>
    %175 = arith.addf %173, %174 : vector<16x64xf32>
    %c0_59 = arith.constant 0 : index
    %c0_60 = arith.constant 0 : index
    %176 = vector.load %arg10[%c0_59, %c0_60] : memref<64x256xf32, #tpu.memory_space<vmem>>, vector<64x256xf32>
    %cst_61 = arith.constant dense<0.000000e+00> : vector<16x256xf32>
    %177 = tpu.matmul %175, %176, %cst_61 {dimension_numbers = #tpu.dot_dimension_numbers<[1], [0], [0], [1], [0, 0, 1, 1], [], []>} : vector<16x64xf32>, vector<64x256xf32>, vector<16x256xf32> -> vector<16x256xf32>
    %c0_62 = arith.constant 0 : index
    %c0_63 = arith.constant 0 : index
    %178 = vector.load %arg11[%c0_62, %c0_63] : memref<1x256xf32, #tpu.memory_space<vmem>>, vector<1x256xf32>
    %179 = vector.broadcast %178 : vector<1x256xf32> to vector<16x256xf32>
    %180 = arith.addf %177, %179 : vector<16x256xf32>
    %cst_64 = arith.constant 0.000000e+00 : f32
    %181 = vector.broadcast %cst_64 : f32 to vector<16x256xf32>
    %182 = arith.maximumf %180, %181 : vector<16x256xf32>
    %c0_65 = arith.constant 0 : index
    %c0_66 = arith.constant 0 : index
    %183 = vector.load %arg12[%c0_65, %c0_66] : memref<256x64xf32, #tpu.memory_space<vmem>>, vector<256x64xf32>
    %cst_67 = arith.constant dense<0.000000e+00> : vector<16x64xf32>
    %184 = tpu.matmul %182, %183, %cst_67 {dimension_numbers = #tpu.dot_dimension_numbers<[1], [0], [0], [1], [0, 0, 1, 1], [], []>} : vector<16x256xf32>, vector<256x64xf32>, vector<16x64xf32> -> vector<16x64xf32>
    %c0_68 = arith.constant 0 : index
    %c0_69 = arith.constant 0 : index
    %185 = vector.load %arg13[%c0_68, %c0_69] : memref<1x64xf32, #tpu.memory_space<vmem>>, vector<1x64xf32>
    %186 = vector.broadcast %185 : vector<1x64xf32> to vector<16x64xf32>
    %187 = arith.addf %184, %186 : vector<16x64xf32>
    %188 = arith.addf %151, %187 : vector<16x64xf32>
    %189 = vector.shape_cast %188 : vector<16x64xf32> to vector<2x8x64xf32>
    %c0_70 = arith.constant 0 : index
    %c0_71 = arith.constant 0 : index
    %c0_72 = arith.constant 0 : index
    %190 = vector.load %arg14[%c0_70, %c0_71, %c0_72] : memref<2x8x64xf32, #tpu.memory_space<vmem>>, vector<2x8x64xf32>
    tpu.vector_store %arg14[%c0_70, %c0_71, %c0_72], %189 {strides = array<i32>} : memref<2x8x64xf32, #tpu.memory_space<vmem>>, vector<2x8x64xf32>,
    return
  }
  func.func @transform_0(%arg0: i32) -> (i32, i32, i32) {
    %c0_i32 = arith.constant 0 : i32
    %c0_i32_0 = arith.constant 0 : i32
    %c0_i32_1 = arith.constant 0 : i32
    return %arg0, %c0_i32, %c0_i32_0 : i32, i32, i32
  }
  func.func @transform_1(%arg0: i32) -> (i32, i32, i32) {
    %c0_i32 = arith.constant 0 : i32
    %c0_i32_0 = arith.constant 0 : i32
    %c0_i32_1 = arith.constant 0 : i32
    %c0_i32_2 = arith.constant 0 : i32
    return %c0_i32, %c0_i32_0, %c0_i32_1 : i32, i32, i32
  }
  func.func @transform_2(%arg0: i32) -> (i32, i32) {
    %c0_i32 = arith.constant 0 : i32
    %c0_i32_0 = arith.constant 0 : i32
    %c0_i32_1 = arith.constant 0 : i32
    return %c0_i32, %c0_i32_0 : i32, i32
  }
  func.func @transform_3(%arg0: i32) -> (i32, i32) {
    %c0_i32 = arith.constant 0 : i32
    %c0_i32_0 = arith.constant 0 : i32
    %c0_i32_1 = arith.constant 0 : i32
    return %c0_i32, %c0_i32_0 : i32, i32
  }
  func.func @transform_4(%arg0: i32) -> (i32, i32) {
    %c0_i32 = arith.constant 0 : i32
    %c0_i32_0 = arith.constant 0 : i32
    %c0_i32_1 = arith.constant 0 : i32
    return %c0_i32, %c0_i32_0 : i32, i32
  }
  func.func @transform_5(%arg0: i32) -> (i32, i32) {
    %c0_i32 = arith.constant 0 : i32
    %c0_i32_0 = arith.constant 0 : i32
    %c0_i32_1 = arith.constant 0 : i32
    return %c0_i32, %c0_i32_0 : i32, i32
  }
  func.func @transform_6(%arg0: i32) -> (i32, i32) {
    %c0_i32 = arith.constant 0 : i32
    %c0_i32_0 = arith.constant 0 : i32
    %c0_i32_1 = arith.constant 0 : i32
    return %c0_i32, %c0_i32_0 : i32, i32
  }
  func.func @transform_7(%arg0: i32) -> (i32, i32, i32) {
    %c0_i32 = arith.constant 0 : i32
    %c0_i32_0 = arith.constant 0 : i32
    %c0_i32_1 = arith.constant 0 : i32
    %c0_i32_2 = arith.constant 0 : i32
    return %c0_i32, %c0_i32_0, %c0_i32_1 : i32, i32, i32
  }
  func.func @transform_8(%arg0: i32) -> (i32, i32) {
    %c0_i32 = arith.constant 0 : i32
    %c0_i32_0 = arith.constant 0 : i32
    %c0_i32_1 = arith.constant 0 : i32
    return %c0_i32, %c0_i32_0 : i32, i32
  }
  func.func @transform_9(%arg0: i32) -> (i32, i32) {
    %c0_i32 = arith.constant 0 : i32
    %c0_i32_0 = arith.constant 0 : i32
    %c0_i32_1 = arith.constant 0 : i32
    return %c0_i32, %c0_i32_0 : i32, i32
  }
  func.func @transform_10(%arg0: i32) -> (i32, i32) {
    %c0_i32 = arith.constant 0 : i32
    %c0_i32_0 = arith.constant 0 : i32
    %c0_i32_1 = arith.constant 0 : i32
    return %c0_i32, %c0_i32_0 : i32, i32
  }
  func.func @transform_11(%arg0: i32) -> (i32, i32) {
    %c0_i32 = arith.constant 0 : i32
    %c0_i32_0 = arith.constant 0 : i32
    %c0_i32_1 = arith.constant 0 : i32
    return %c0_i32, %c0_i32_0 : i32, i32
  }
  func.func @transform_12(%arg0: i32) -> (i32, i32) {
    %c0_i32 = arith.constant 0 : i32
    %c0_i32_0 = arith.constant 0 : i32
    %c0_i32_1 = arith.constant 0 : i32
    return %c0_i32, %c0_i32_0 : i32, i32
  }
  func.func @transform_13(%arg0: i32) -> (i32, i32, i32) {
    %c0_i32 = arith.constant 0 : i32
    %c0_i32_0 = arith.constant 0 : i32
    %c0_i32_1 = arith.constant 0 : i32
    return %arg0, %c0_i32, %c0_i32_0 : i32, i32, i32
  }
  func.func @transform_14(%arg0: i32) -> (i32, i32) {
    %c0_i32 = arith.constant 0 : i32
    %c0_i32_0 = arith.constant 0 : i32
    return %arg0, %c0_i32 : i32, i32
  }
}

</mosaic_0001>

<llo_original>
// kernel: tpu_custom_call.1
$region0: #{tpu_custom_call.1}
  #allocation0 [shape = 'u32[]', space=smem, size = 0x4, offset = 0x4, fixed_abs, tag = 'smem constant byte address 0x4 - core index']
  #allocation1 [shape = 'u32[72,128]{1,0:T(1,128)}', space=vmem, size = 0x9000, scoped, tag = 'internal scratch']
  %s0 = inlined_call_operand.vmem [shape: f32[2,8,64], index: 0, kind: input, shape index: {}]
  %s1 = inlined_call_operand.vmem [shape: f32[4,8,8], index: 1, kind: input, shape index: {}]
  %s2 = inlined_call_operand.vmem [shape: f32[1,64], index: 2, kind: input, shape index: {}]
  %s3 = inlined_call_operand.vmem [shape: f32[1,64], index: 3, kind: input, shape index: {}]
  %s4 = inlined_call_operand.vmem [shape: f32[1,64], index: 4, kind: input, shape index: {}]
  %s5 = inlined_call_operand.vmem [shape: f32[1,64], index: 5, kind: input, shape index: {}]
  %s6 = inlined_call_operand.vmem [shape: f32[64,192], index: 6, kind: input, shape index: {}]
  %s7 = inlined_call_operand.vmem [shape: f32[4,16,64], index: 7, kind: input, shape index: {}]
  %s8 = inlined_call_operand.vmem [shape: f32[1,64], index: 8, kind: input, shape index: {}]
  %s9 = inlined_call_operand.vmem [shape: f32[64,256], index: 9, kind: input, shape index: {}]
  %s10 = inlined_call_operand.vmem [shape: f32[1,256], index: 10, kind: input, shape index: {}]
  %s11 = inlined_call_operand.vmem [shape: f32[256,64], index: 11, kind: input, shape index: {}]
  %s12 = inlined_call_operand.vmem [shape: f32[1,64], index: 12, kind: input, shape index: {}]
  %s13 = inlined_call_operand.hbm [shape: f32[2,8,64], index: 13, kind: output, shape index: {0}]
  %s14 = inlined_call_operand.hbm [shape: f32[2,256], index: 14, kind: output, shape index: {1}]
  %15 = xla_tuple %s13, %s14
  %s16 = sld [smem:[#allocation0]]
  $region70: #{tpu_custom_call.1} parent=0
    _
  %s18 = ssub.s32 1, %s16
  %s19 = scalar_select 0, %s18, %s16
  $region1: #{tpu_custom_call.1} parent=0
    #allocation2 [shape = 'u8[8192]{0}', space=vmem, size = 0x2000, scoped, tag = 'output window, operand 0, single buffered']
    #allocation3 [shape = 's32[1]{0}', space=sflag, size = 0x4, scoped, tag = 'scoped memory for tpu_custom_call.1']
    #allocation4 [shape = 'u8[2048]{0}', space=vmem, size = 0x800, scoped, tag = 'output window, operand 1, single buffered']
    #allocation5 [shape = 's32[1]{0}', space=sflag, size = 0x4, scoped, tag = 'scoped memory for tpu_custom_call.1']
    %20 = vsyncpa [#allocation3], 0
    %21 = vsyncpa [#allocation5], 0
    // Predicated region
    $region2: #{tpu_custom_call.1} parent=1 // pred_check
      _
    $region3: #{tpu_custom_call.1} parent=1 // pred_check_branch
      %23 = sbr.rel (0) target = $region5
    $region4: #{tpu_custom_call.1} parent=1 // pred_region
      _
    $region5: #{tpu_custom_call.1} parent=1 // pred_fallthru
      _
    // Predicated region
    $region6: #{tpu_custom_call.1} parent=1 // pred_check
      _
    $region7: #{tpu_custom_call.1} parent=1 // pred_check_branch
      %25 = sbr.rel (0) target = $region9
    $region8: #{tpu_custom_call.1} parent=1 // pred_region
      _
    $region9: #{tpu_custom_call.1} parent=1 // pred_fallthru
      _
    // Predicated region
    $region10: #{tpu_custom_call.1} parent=1 // pred_check
      _
    $region11: #{tpu_custom_call.1} parent=1 // pred_check_branch
      %27 = sbr.rel (0) target = $region13
    $region12: #{tpu_custom_call.1} parent=1 // pred_region
      _
    $region13: #{tpu_custom_call.1} parent=1 // pred_fallthru
      _
    // Predicated region
    $region14: #{tpu_custom_call.1} parent=1 // pred_check
      _
    $region15: #{tpu_custom_call.1} parent=1 // pred_check_branch
      %29 = sbr.rel (0) target = $region17
    $region16: #{tpu_custom_call.1} parent=1 // pred_region
      _
    $region17: #{tpu_custom_call.1} parent=1 // pred_fallthru
      _
    // Predicated region
    $region18: #{tpu_custom_call.1} parent=1 // pred_check
      _
    $region19: #{tpu_custom_call.1} parent=1 // pred_check_branch
      %31 = sbr.rel (0) target = $region21
    $region20: #{tpu_custom_call.1} parent=1 // pred_region
      _
    $region21: #{tpu_custom_call.1} parent=1 // pred_fallthru
      _
    // Predicated region
    $region22: #{tpu_custom_call.1} parent=1 // pred_check
      _
    $region23: #{tpu_custom_call.1} parent=1 // pred_check_branch
      %33 = sbr.rel (0) target = $region25
    $region24: #{tpu_custom_call.1} parent=1 // pred_region
      _
    $region25: #{tpu_custom_call.1} parent=1 // pred_fallthru
      _
    // Predicated region
    $region26: #{tpu_custom_call.1} parent=1 // pred_check
      _
    $region27: #{tpu_custom_call.1} parent=1 // pred_check_branch
      %35 = sbr.rel (0) target = $region29
    $region28: #{tpu_custom_call.1} parent=1 // pred_region
      _
    $region29: #{tpu_custom_call.1} parent=1 // pred_fallthru
      _
    // Predicated region
    $region30: #{tpu_custom_call.1} parent=1 // pred_check
      _
    $region31: #{tpu_custom_call.1} parent=1 // pred_check_branch
      %37 = sbr.rel (0) target = $region33
    $region32: #{tpu_custom_call.1} parent=1 // pred_region
      _
    $region33: #{tpu_custom_call.1} parent=1 // pred_fallthru
      _
    // Predicated region
    $region34: #{tpu_custom_call.1} parent=1 // pred_check
      _
    $region35: #{tpu_custom_call.1} parent=1 // pred_check_branch
      %39 = sbr.rel (0) target = $region37
    $region36: #{tpu_custom_call.1} parent=1 // pred_region
      _
    $region37: #{tpu_custom_call.1} parent=1 // pred_fallthru
      _
    // Predicated region
    $region38: #{tpu_custom_call.1} parent=1 // pred_check
      _
    $region39: #{tpu_custom_call.1} parent=1 // pred_check_branch
      %41 = sbr.rel (0) target = $region41
    $region40: #{tpu_custom_call.1} parent=1 // pred_region
      _
    $region41: #{tpu_custom_call.1} parent=1 // pred_fallthru
      _
    // Predicated region
    $region42: #{tpu_custom_call.1} parent=1 // pred_check
      _
    $region43: #{tpu_custom_call.1} parent=1 // pred_check_branch
      %43 = sbr.rel (0) target = $region45
    $region44: #{tpu_custom_call.1} parent=1 // pred_region
      _
    $region45: #{tpu_custom_call.1} parent=1 // pred_fallthru
      _
    // Predicated region
    $region46: #{tpu_custom_call.1} parent=1 // pred_check
      _
    $region47: #{tpu_custom_call.1} parent=1 // pred_check_branch
      %45 = sbr.rel (0) target = $region49
    $region48: #{tpu_custom_call.1} parent=1 // pred_region
      _
    $region49: #{tpu_custom_call.1} parent=1 // pred_fallthru
      _
    // Predicated region
    $region50: #{tpu_custom_call.1} parent=1 // pred_check
      _
    $region51: #{tpu_custom_call.1} parent=1 // pred_check_branch
      %47 = sbr.rel (0) target = $region53
    $region52: #{tpu_custom_call.1} parent=1 // pred_region
      _
    $region53: #{tpu_custom_call.1} parent=1 // pred_fallthru
      _
    %v48 = vld [vmem:[%s0] sm:$0xff]
    %v49 = vld [vmem:[%s0 + $0x8] sm:$0xff]
    %v50 = vld [vmem:[%s2] sm:$0x1]
    %v51 = vld [vmem:[%s3] sm:$0x1]
    %vm52 = vcmask 523264
    %v53 = vsel %vm52, %v48, 0.0
    %54 = vadd.xlane.f32.xlu0 %v53
    %v55 = vpop.xlane.xlu0 %54
    %v56 = vsel %vm52, %v49, 0.0
    %57 = vadd.xlane.f32.xlu0 %v56
    %v58 = vpop.xlane.xlu0 %57
    %v59 = vrcp.pop 64.0
    %v60 = vmul.f32 64.0, %v59
    %v61 = vsub.f32 1.0, %v60
    %v62 = vmul.f32 %v59, %v61
    %v63 = vadd.f32 %v59, %v62
    %vm64 = vweird.f32 %v59
    %v65 = vsel %vm64, %v59, %v63
    %v66 = vmul.f32 %v55, %v65
    %v67 = vmul.f32 %v58, %v65
    %v68 = vsub.f32 %v48, %v66
    %v69 = vsub.f32 %v49, %v67
    %v70 = vmul.f32 %v68, %v68
    %v71 = vmul.f32 %v69, %v69
    %v72 = vsel %vm52, %v70, 0.0
    %73 = vadd.xlane.f32.xlu0 %v72
    %v74 = vpop.xlane.xlu0 %73
    %v75 = vsel %vm52, %v71, 0.0
    %76 = vadd.xlane.f32.xlu0 %v75
    %v77 = vpop.xlane.xlu0 %76
    %v78 = vmul.f32 %v74, %v65
    %v79 = vmul.f32 %v77, %v65
    %v80 = vadd.f32 %v78, 1e-05
    %v81 = vadd.f32 %v79, 1e-05
    %v82 = vrsqrt.pop %v80
    %v83 = vmul.f32 %v82, %v80
    %v84 = vmul.f32 %v83, %v82
    %v85 = vmul.f32 0.5, %v84
    %v86 = vsub.f32 1.5, %v85
    %v87 = vmul.f32 %v82, %v86
    %vm88 = vweird.f32 %v80
    %vm89 = vweird.f32 %v82
    %vm90 = vmor %vm88, %vm89
    %v91 = vsel %vm90, %v82, %v87
    %v92 = vrsqrt.pop %v81
    %v93 = vmul.f32 %v92, %v81
    %v94 = vmul.f32 %v93, %v92
    %v95 = vmul.f32 0.5, %v94
    %v96 = vsub.f32 1.5, %v95
    %v97 = vmul.f32 %v92, %v96
    %vm98 = vweird.f32 %v81
    %vm99 = vweird.f32 %v92
    %vm100 = vmor %vm98, %vm99
    %v101 = vsel %vm100, %v92, %v97
    %v102 = vmul.f32 %v68, %v91
    %v103 = vmul.f32 %v69, %v101
    %v105 = vperm.slane %v50, 0
    %v107 = vmul.f32 %v102, %v105
    %v108 = vmul.f32 %v103, %v105
    %v110 = vperm.slane %v51, 0
    %v112 = vadd.f32 %v107, %v110
    %v113 = vadd.f32 %v108, %v110
    %v114 = vld [vmem:[%s6] sm:$0xff]
    %v115 = vld [vmem:[%s6 + $0x8] sm:$0xff]
    %v116 = vld [vmem:[%s6 + $0x10] sm:$0xff]
    %v117 = vld [vmem:[%s6 + $0x18] sm:$0xff]
    %v118 = vld [vmem:[%s6 + $0x20] sm:$0xff]
    %v119 = vld [vmem:[%s6 + $0x28] sm:$0xff]
    %v120 = vld [vmem:[%s6 + $0x30] sm:$0xff]
    %v121 = vld [vmem:[%s6 + $0x38] sm:$0xff]
    %v122 = vld [vmem:[%s6 + $0x40] sm:$0xff]
    %v123 = vld [vmem:[%s6 + $0x48] sm:$0xff]
    %v124 = vld [vmem:[%s6 + $0x50] sm:$0xff]
    %v125 = vld [vmem:[%s6 + $0x58] sm:$0xff]
    %v126 = vld [vmem:[%s6 + $0x60] sm:$0xff]
    %v127 = vld [vmem:[%s6 + $0x68] sm:$0xff]
    %v128 = vld [vmem:[%s6 + $0x70] sm:$0xff]
    %v129 = vld [vmem:[%s6 + $0x78] sm:$0xff]
    %v131 = vsel %vm52, %v112, 0
    %v134 = vsel %vm52, %v113, 0
    %136 = vmatpush.msra.mxu0 0.0
    %137 = vmatpush.msra.mxu0 0.0
    %138 = vmatpush.msra.mxu0 0.0
    %139 = vmatpush.msra.mxu0 0.0
    %140 = vmatpush.msra.mxu0 0.0
    %141 = vmatpush.msra.mxu0 0.0
    %142 = vmatpush.msra.mxu0 0.0
    %143 = vmatpush.msra.mxu0 0.0
    %144 = vmatpush.msra.mxu0 %v128
    %145 = vmatpush.msra.mxu0 %v126
    %146 = vmatpush.msra.mxu0 %v124
    %147 = vmatpush.msra.mxu0 %v122
    %148 = vmatpush.msra.mxu0 %v120
    %149 = vmatpush.msra.mxu0 %v118
    %150 = vmatpush.msra.mxu0 %v116
    %151 = vmatpush.msra.mxu0 %v114
    %152 = vmatmul.f32.gmra.mxu0 %v131
    %v153 = vpop.f32.mrf.mxu0
    %v154 = vadd.f32 0.0, %v153
    %155 = vmatmul.f32.gmra.mxu0 %v134
    %v156 = vpop.f32.mrf.mxu0
    %v157 = vadd.f32 0.0, %v156
    %158 = vdwg.mxu0
    %159 = vmatpush.msra.mxu0 0.0
    %160 = vmatpush.msra.mxu0 0.0
    %161 = vmatpush.msra.mxu0 0.0
    %162 = vmatpush.msra.mxu0 0.0
    %163 = vmatpush.msra.mxu0 0.0
    %164 = vmatpush.msra.mxu0 0.0
    %165 = vmatpush.msra.mxu0 0.0
    %166 = vmatpush.msra.mxu0 0.0
    %167 = vmatpush.msra.mxu0 %v129
    %168 = vmatpush.msra.mxu0 %v127
    %169 = vmatpush.msra.mxu0 %v125
    %170 = vmatpush.msra.mxu0 %v123
    %171 = vmatpush.msra.mxu0 %v121
    %172 = vmatpush.msra.mxu0 %v119
    %173 = vmatpush.msra.mxu0 %v117
    %174 = vmatpush.msra.mxu0 %v115
    %175 = vmatmul.f32.gmra.mxu0 %v131
    %v176 = vpop.f32.mrf.mxu0
    %v177 = vadd.f32 0.0, %v176
    %178 = vmatmul.f32.gmra.mxu0 %v134
    %v179 = vpop.f32.mrf.mxu0
    %v180 = vadd.f32 0.0, %v179
    %181 = vdwg.mxu0
    %v182 = vld [vmem:[%s1] sm:$0xff]
    %v183 = vld [vmem:[%s1 + $0x8] sm:$0xff]
    %v184 = vld [vmem:[%s1 + $0x10] sm:$0xff]
    %v185 = vld [vmem:[%s1 + $0x18] sm:$0xff]
    %187 = vrot.lane.b32.xlu0 %v154, 64
    %v188 = vpop.permute.xlu0 %187
    %vm189 = vcmask 130048
    %v190 = vsel %vm189, %v154, 0
    %v192 = vsel %vm189, %v188, 0
    %194 = vmatpush.xpose.msra.mxu0 0.0
    %195 = vmatpush.xpose.msra.mxu0 0.0
    %196 = vmatpush.xpose.msra.mxu0 0.0
    %197 = vmatpush.xpose.msra.mxu0 0.0
    %198 = vmatpush.xpose.msra.mxu0 0.0
    %199 = vmatpush.xpose.msra.mxu0 0.0
    %200 = vmatpush.xpose.msra.mxu0 0.0
    %201 = vmatpush.xpose.msra.mxu0 0.0
    %202 = vmatpush.xpose.msra.mxu0 0.0
    %203 = vmatpush.xpose.msra.mxu0 0.0
    %204 = vmatpush.xpose.msra.mxu0 0.0
    %205 = vmatpush.xpose.msra.mxu0 0.0
    %206 = vmatpush.xpose.msra.mxu0 0.0
    %207 = vmatpush.xpose.msra.mxu0 0.0
    %208 = vmatpush.xpose.msra.mxu0 0.0
    %209 = vmatpush.xpose.msra.mxu0 %v192
    %210 = vmatmul.f32.gmra.mxu0 %v190
    %v211 = vpop.f32.mrf.mxu0
    %v212 = vadd.f32 %v182, %v211
    %213 = vdwg.mxu0
    %215 = vrot.lane.b32.xlu0 %v157, 64
    %v216 = vpop.permute.xlu0 %215
    %v217 = vsel %vm189, %v157, 0
    %v219 = vsel %vm189, %v216, 0
    %221 = vmatpush.xpose.msra.mxu0 0.0
    %222 = vmatpush.xpose.msra.mxu0 0.0
    %223 = vmatpush.xpose.msra.mxu0 0.0
    %224 = vmatpush.xpose.msra.mxu0 0.0
    %225 = vmatpush.xpose.msra.mxu0 0.0
    %226 = vmatpush.xpose.msra.mxu0 0.0
    %227 = vmatpush.xpose.msra.mxu0 0.0
    %228 = vmatpush.xpose.msra.mxu0 0.0
    %229 = vmatpush.xpose.msra.mxu0 0.0
    %230 = vmatpush.xpose.msra.mxu0 0.0
    %231 = vmatpush.xpose.msra.mxu0 0.0
    %232 = vmatpush.xpose.msra.mxu0 0.0
    %233 = vmatpush.xpose.msra.mxu0 0.0
    %234 = vmatpush.xpose.msra.mxu0 0.0
    %235 = vmatpush.xpose.msra.mxu0 0.0
    %236 = vmatpush.xpose.msra.mxu0 %v219
    %237 = vmatmul.f32.gmra.mxu0 %v217
    %v238 = vpop.f32.mrf.mxu0
    %v239 = vadd.f32 %v182, %v238
    %240 = vdwg.mxu0
    %vm241 = vcmask 64512
    %v242 = vsel %vm241, %v212, -inf
    %243 = vmax.xlane.f32.xlu0 %v242
    %v244 = vpop.xlane.xlu0 %243
    %v245 = vsel %vm241, %v239, -inf
    %246 = vmax.xlane.f32.xlu0 %v245
    %v247 = vpop.xlane.xlu0 %246
    %v248 = vsub.f32 %v212, %v244
    %v249 = vsub.f32 %v239, %v247
    %v250 = vmul.f32 %v248, 1.442695
    %v251 = vpow.pop %v250
    %v252 = vmul.f32 %v249, 1.442695
    %v253 = vpow.pop %v252
    %v254 = vsel %vm241, %v251, 0.0
    %255 = vadd.xlane.f32.xlu0 %v254
    %v256 = vpop.xlane.xlu0 %255
    %v257 = vsel %vm241, %v253, 0.0
    %258 = vadd.xlane.f32.xlu0 %v257
    %v259 = vpop.xlane.xlu0 %258
    %v260 = vrcp.pop %v256
    %v261 = vmul.f32 %v256, %v260
    %v262 = vsub.f32 1.0, %v261
    %v263 = vmul.f32 %v260, %v262
    %v264 = vadd.f32 %v260, %v263
    %vm265 = vweird.f32 %v256
    %vm266 = vweird.f32 %v260
    %vm267 = vmor %vm265, %vm266
    %v268 = vsel %vm267, %v260, %v264
    %v269 = vand.u32 2147483647, %v256
    %vm270 = vcmp.eq.f32.partialorder %v269, 8.507059e+37
    %v271 = vand.u32 %v256, 2147483648
    %v272 = vor.u32 1.1754944e-38, %v271
    %v273 = vsel %vm270, %v272, %v268
    %v274 = vrcp.pop %v259
    %v275 = vmul.f32 %v259, %v274
    %v276 = vsub.f32 1.0, %v275
    %v277 = vmul.f32 %v274, %v276
    %v278 = vadd.f32 %v274, %v277
    %vm279 = vweird.f32 %v259
    %vm280 = vweird.f32 %v274
    %vm281 = vmor %vm279, %vm280
    %v282 = vsel %vm281, %v274, %v278
    %v283 = vand.u32 2147483647, %v259
    %vm284 = vcmp.eq.f32.partialorder %v283, 8.507059e+37
    %v285 = vand.u32 %v259, 2147483648
    %v286 = vor.u32 1.1754944e-38, %v285
    %v287 = vsel %vm284, %v286, %v282
    %v288 = vmul.f32 %v251, %v273
    %v289 = vmul.f32 %v253, %v287
    %v290 = vrot.slane %v288, 4
    %vm291 = vcmask 1047556
    %v292 = vsel %vm291, 0.0, %v290
    %v294 = vunpack.c.l.s4 1983009808
    %v295 = vunpack.c.0.s8 %v294
    %v296 = vperm.slane %v288, %v295
    %v298 = vunpack.c.l.s4 1983009808
    %v299 = vunpack.c.0.s8 %v298
    %v300 = vperm.slane %v292, %v299
    %v301 = vrot.slane %v289, 4
    %v302 = vsel %vm291, 0.0, %v301
    %v304 = vunpack.c.l.s4 1983009808
    %v305 = vunpack.c.0.s8 %v304
    %v306 = vperm.slane %v289, %v305
    %v308 = vunpack.c.l.s4 1983009808
    %v309 = vunpack.c.0.s8 %v308
    %v310 = vperm.slane %v302, %v309
    %v311 = vrot.slane %v306, 4
    %v312 = vsel %vm291, %v311, %v296
    %v313 = vrot.slane %v296, 4
    %v314 = vsel %vm291, %v306, %v313
    %v316 = vunpack.c.l.s4 1934713408
    %v317 = vunpack.c.0.s8 %v316
    %v318 = vperm.slane %v312, %v317
    %v320 = vunpack.c.l.s4 1934713408
    %v321 = vunpack.c.0.s8 %v320
    %v322 = vperm.slane %v314, %v321
    %v323 = vrot.slane %v310, 4
    %v324 = vsel %vm291, %v323, %v300
    %v325 = vrot.slane %v300, 4
    %v326 = vsel %vm291, %v310, %v325
    %v328 = vunpack.c.l.s4 1934713408
    %v329 = vunpack.c.0.s8 %v328
    %v330 = vperm.slane %v324, %v329
    %v332 = vunpack.c.l.s4 1934713408
    %v333 = vunpack.c.0.s8 %v332
    %v334 = vperm.slane %v326, %v333
    %v335 = vrot.slane %v318, 4
    %v336 = vsel %vm291, 0.0, %v335
    %v337 = vrot.slane %v322, 4
    %v338 = vsel %vm291, 0.0, %v337
    %v339 = vrot.slane %v330, 4
    %v340 = vsel %vm291, 0.0, %v339
    %v341 = vrot.slane %v334, 4
    %v342 = vsel %vm291, 0.0, %v341
    %344 = vrot.lane.b32.xlu0 %v336, 8
    %v345 = vpop.permute.xlu0 %344
    %348 = vrot.lane.b32.xlu0 %v322, 16
    %v349 = vpop.permute.xlu0 %348
    %352 = vrot.lane.b32.xlu0 %v338, 24
    %v353 = vpop.permute.xlu0 %352
    %356 = vrot.lane.b32.xlu0 %v330, 32
    %v357 = vpop.permute.xlu0 %356
    %360 = vrot.lane.b32.xlu0 %v340, 40
    %v361 = vpop.permute.xlu0 %360
    %364 = vrot.lane.b32.xlu0 %v334, 48
    %v365 = vpop.permute.xlu0 %364
    %368 = vrot.lane.b32.xlu0 %v342, 56
    %v369 = vpop.permute.xlu0 %368
    %v371 = vsel %vm241, %v318, %v345
    %v372 = vsel %vm189, %v371, %v349
    %vm373 = vcmask 195584
    %v374 = vsel %vm373, %v372, %v353
    %vm375 = vcmask 261120
    %v376 = vsel %vm375, %v374, %v357
    %vm377 = vcmask 326656
    %v378 = vsel %vm377, %v376, %v361
    %vm379 = vcmask 392192
    %v380 = vsel %vm379, %v378, %v365
    %vm381 = vcmask 457728
    %v382 = vsel %vm381, %v380, %v369
    %v384 = vsel %vm241, %v288, 0
    %386 = vmatpush.msra.mxu0 0.0
    %387 = vmatpush.msra.mxu0 0.0
    %388 = vmatpush.msra.mxu0 0.0
    %389 = vmatpush.msra.mxu0 0.0
    %390 = vmatpush.msra.mxu0 0.0
    %391 = vmatpush.msra.mxu0 0.0
    %392 = vmatpush.msra.mxu0 0.0
    %393 = vmatpush.msra.mxu0 0.0
    %394 = vmatpush.msra.mxu0 0.0
    %395 = vmatpush.msra.mxu0 0.0
    %396 = vmatpush.msra.mxu0 0.0
    %397 = vmatpush.msra.mxu0 0.0
    %398 = vmatpush.msra.mxu0 0.0
    %399 = vmatpush.msra.mxu0 0.0
    %400 = vmatpush.msra.mxu0 0.0
    %401 = vmatpush.msra.mxu0 %v177
    %402 = vmatmul.f32.gmra.mxu0 %v384
    %v403 = vpop.f32.mrf.mxu0
    %v404 = vadd.f32 0.0, %v403
    %405 = vdwg.mxu0
    %v407 = vsel %vm241, %v289, 0
    %409 = vmatpush.msra.mxu0 0.0
    %410 = vmatpush.msra.mxu0 0.0
    %411 = vmatpush.msra.mxu0 0.0
    %412 = vmatpush.msra.mxu0 0.0
    %413 = vmatpush.msra.mxu0 0.0
    %414 = vmatpush.msra.mxu0 0.0
    %415 = vmatpush.msra.mxu0 0.0
    %416 = vmatpush.msra.mxu0 0.0
    %417 = vmatpush.msra.mxu0 0.0
    %418 = vmatpush.msra.mxu0 0.0
    %419 = vmatpush.msra.mxu0 0.0
    %420 = vmatpush.msra.mxu0 0.0
    %421 = vmatpush.msra.mxu0 0.0
    %422 = vmatpush.msra.mxu0 0.0
    %423 = vmatpush.msra.mxu0 0.0
    %424 = vmatpush.msra.mxu0 %v180
    %425 = vmatmul.f32.gmra.mxu0 %v407
    %v426 = vpop.f32.mrf.mxu0
    %v427 = vadd.f32 0.0, %v426
    %428 = vdwg.mxu0
    %v429 = vld [vmem:[%s7] sm:$0xff]
    %v430 = vld [vmem:[%s7 + $0x8] sm:$0xff]
    %431 = vrot.lane.b32.xlu0 %v154, 112
    %v432 = vpop.permute.xlu0 %431
    %433 = vrot.lane.b32.xlu0 %v154, 48
    %v434 = vpop.permute.xlu0 %433
    %v435 = vsel %vm189, %v432, 0
    %v437 = vsel %vm189, %v434, 0
    %439 = vmatpush.xpose.msra.mxu0 0.0
    %440 = vmatpush.xpose.msra.mxu0 0.0
    %441 = vmatpush.xpose.msra.mxu0 0.0
    %442 = vmatpush.xpose.msra.mxu0 0.0
    %443 = vmatpush.xpose.msra.mxu0 0.0
    %444 = vmatpush.xpose.msra.mxu0 0.0
    %445 = vmatpush.xpose.msra.mxu0 0.0
    %446 = vmatpush.xpose.msra.mxu0 0.0
    %447 = vmatpush.xpose.msra.mxu0 0.0
    %448 = vmatpush.xpose.msra.mxu0 0.0
    %449 = vmatpush.xpose.msra.mxu0 0.0
    %450 = vmatpush.xpose.msra.mxu0 0.0
    %451 = vmatpush.xpose.msra.mxu0 0.0
    %452 = vmatpush.xpose.msra.mxu0 0.0
    %453 = vmatpush.xpose.msra.mxu0 0.0
    %454 = vmatpush.xpose.msra.mxu0 %v437
    %455 = vmatmul.f32.gmra.mxu0 %v435
    %v456 = vpop.f32.mrf.mxu0
    %v457 = vadd.f32 %v183, %v456
    %458 = vdwg.mxu0
    %459 = vrot.lane.b32.xlu0 %v157, 112
    %v460 = vpop.permute.xlu0 %459
    %461 = vrot.lane.b32.xlu0 %v157, 48
    %v462 = vpop.permute.xlu0 %461
    %v463 = vsel %vm189, %v460, 0
    %v465 = vsel %vm189, %v462, 0
    %467 = vmatpush.xpose.msra.mxu0 0.0
    %468 = vmatpush.xpose.msra.mxu0 0.0
    %469 = vmatpush.xpose.msra.mxu0 0.0
    %470 = vmatpush.xpose.msra.mxu0 0.0
    %471 = vmatpush.xpose.msra.mxu0 0.0
    %472 = vmatpush.xpose.msra.mxu0 0.0
    %473 = vmatpush.xpose.msra.mxu0 0.0
    %474 = vmatpush.xpose.msra.mxu0 0.0
    %475 = vmatpush.xpose.msra.mxu0 0.0
    %476 = vmatpush.xpose.msra.mxu0 0.0
    %477 = vmatpush.xpose.msra.mxu0 0.0
    %478 = vmatpush.xpose.msra.mxu0 0.0
    %479 = vmatpush.xpose.msra.mxu0 0.0
    %480 = vmatpush.xpose.msra.mxu0 0.0
    %481 = vmatpush.xpose.msra.mxu0 0.0
    %482 = vmatpush.xpose.msra.mxu0 %v465
    %483 = vmatmul.f32.gmra.mxu0 %v463
    %v484 = vpop.f32.mrf.mxu0
    %v485 = vadd.f32 %v183, %v484
    %486 = vdwg.mxu0
    %v487 = vsel %vm241, %v457, -inf
    %488 = vmax.xlane.f32.xlu0 %v487
    %v489 = vpop.xlane.xlu0 %488
    %v490 = vsel %vm241, %v485, -inf
    %491 = vmax.xlane.f32.xlu0 %v490
    %v492 = vpop.xlane.xlu0 %491
    %v493 = vsub.f32 %v457, %v489
    %v494 = vsub.f32 %v485, %v492
    %v495 = vmul.f32 %v493, 1.442695
    %v496 = vpow.pop %v495
    %v497 = vmul.f32 %v494, 1.442695
    %v498 = vpow.pop %v497
    %v499 = vsel %vm241, %v496, 0.0
    %500 = vadd.xlane.f32.xlu0 %v499
    %v501 = vpop.xlane.xlu0 %500
    %v502 = vsel %vm241, %v498, 0.0
    %503 = vadd.xlane.f32.xlu0 %v502
    %v504 = vpop.xlane.xlu0 %503
    %v505 = vrcp.pop %v501
    %v506 = vmul.f32 %v501, %v505
    %v507 = vsub.f32 1.0, %v506
    %v508 = vmul.f32 %v505, %v507
    %v509 = vadd.f32 %v505, %v508
    %vm510 = vweird.f32 %v501
    %vm511 = vweird.f32 %v505
    %vm512 = vmor %vm510, %vm511
    %v513 = vsel %vm512, %v505, %v509
    %v514 = vand.u32 2147483647, %v501
    %vm515 = vcmp.eq.f32.partialorder %v514, 8.507059e+37
    %v516 = vand.u32 %v501, 2147483648
    %v517 = vor.u32 1.1754944e-38, %v516
    %v518 = vsel %vm515, %v517, %v513
    %v519 = vrcp.pop %v504
    %v520 = vmul.f32 %v504, %v519
    %v521 = vsub.f32 1.0, %v520
    %v522 = vmul.f32 %v519, %v521
    %v523 = vadd.f32 %v519, %v522
    %vm524 = vweird.f32 %v504
    %vm525 = vweird.f32 %v519
    %vm526 = vmor %vm524, %vm525
    %v527 = vsel %vm526, %v519, %v523
    %v528 = vand.u32 2147483647, %v504
    %vm529 = vcmp.eq.f32.partialorder %v528, 8.507059e+37
    %v530 = vand.u32 %v504, 2147483648
    %v531 = vor.u32 1.1754944e-38, %v530
    %v532 = vsel %vm529, %v531, %v527
    %v533 = vmul.f32 %v496, %v518
    %v534 = vmul.f32 %v498, %v532
    %v535 = vrot.slane %v533, 4
    %v536 = vsel %vm291, 0.0, %v535
    %v538 = vunpack.c.l.s4 1983009808
    %v539 = vunpack.c.0.s8 %v538
    %v540 = vperm.slane %v533, %v539
    %v542 = vunpack.c.l.s4 1983009808
    %v543 = vunpack.c.0.s8 %v542
    %v544 = vperm.slane %v536, %v543
    %v545 = vrot.slane %v534, 4
    %v546 = vsel %vm291, 0.0, %v545
    %v548 = vunpack.c.l.s4 1983009808
    %v549 = vunpack.c.0.s8 %v548
    %v550 = vperm.slane %v534, %v549
    %v552 = vunpack.c.l.s4 1983009808
    %v553 = vunpack.c.0.s8 %v552
    %v554 = vperm.slane %v546, %v553
    %v555 = vrot.slane %v550, 4
    %v556 = vsel %vm291, %v555, %v540
    %v557 = vrot.slane %v540, 4
    %v558 = vsel %vm291, %v550, %v557
    %v560 = vunpack.c.l.s4 1934713408
    %v561 = vunpack.c.0.s8 %v560
    %v562 = vperm.slane %v556, %v561
    %v564 = vunpack.c.l.s4 1934713408
    %v565 = vunpack.c.0.s8 %v564
    %v566 = vperm.slane %v558, %v565
    %v567 = vrot.slane %v554, 4
    %v568 = vsel %vm291, %v567, %v544
    %v569 = vrot.slane %v544, 4
    %v570 = vsel %vm291, %v554, %v569
    %v572 = vunpack.c.l.s4 1934713408
    %v573 = vunpack.c.0.s8 %v572
    %v574 = vperm.slane %v568, %v573
    %v576 = vunpack.c.l.s4 1934713408
    %v577 = vunpack.c.0.s8 %v576
    %v578 = vperm.slane %v570, %v577
    %v579 = vrot.slane %v562, 4
    %v580 = vsel %vm291, 0.0, %v579
    %v581 = vrot.slane %v566, 4
    %v582 = vsel %vm291, 0.0, %v581
    %v583 = vrot.slane %v574, 4
    %v584 = vsel %vm291, 0.0, %v583
    %v585 = vrot.slane %v578, 4
    %v586 = vsel %vm291, 0.0, %v585
    %588 = vrot.lane.b32.xlu0 %v580, 8
    %v589 = vpop.permute.xlu0 %588
    %592 = vrot.lane.b32.xlu0 %v566, 16
    %v593 = vpop.permute.xlu0 %592
    %596 = vrot.lane.b32.xlu0 %v582, 24
    %v597 = vpop.permute.xlu0 %596
    %600 = vrot.lane.b32.xlu0 %v574, 32
    %v601 = vpop.permute.xlu0 %600
    %604 = vrot.lane.b32.xlu0 %v584, 40
    %v605 = vpop.permute.xlu0 %604
    %608 = vrot.lane.b32.xlu0 %v578, 48
    %v609 = vpop.permute.xlu0 %608
    %612 = vrot.lane.b32.xlu0 %v586, 56
    %v613 = vpop.permute.xlu0 %612
    %v615 = vsel %vm241, %v562, %v589
    %v616 = vsel %vm189, %v615, %v593
    %v617 = vsel %vm373, %v616, %v597
    %v618 = vsel %vm375, %v617, %v601
    %v619 = vsel %vm377, %v618, %v605
    %v620 = vsel %vm379, %v619, %v609
    %v621 = vsel %vm381, %v620, %v613
    %623 = vrot.lane.b32.xlu0 %v177, 112
    %v624 = vpop.permute.xlu0 %623
    %v627 = vsel %vm241, %v533, 0
    %629 = vmatpush.msra.mxu0 0.0
    %630 = vmatpush.msra.mxu0 0.0
    %631 = vmatpush.msra.mxu0 0.0
    %632 = vmatpush.msra.mxu0 0.0
    %633 = vmatpush.msra.mxu0 0.0
    %634 = vmatpush.msra.mxu0 0.0
    %635 = vmatpush.msra.mxu0 0.0
    %636 = vmatpush.msra.mxu0 0.0
    %637 = vmatpush.msra.mxu0 0.0
    %638 = vmatpush.msra.mxu0 0.0
    %639 = vmatpush.msra.mxu0 0.0
    %640 = vmatpush.msra.mxu0 0.0
    %641 = vmatpush.msra.mxu0 0.0
    %642 = vmatpush.msra.mxu0 0.0
    %643 = vmatpush.msra.mxu0 0.0
    %644 = vmatpush.msra.mxu0 %v624
    %645 = vmatmul.f32.gmra.mxu0 %v627
    %v646 = vpop.f32.mrf.mxu0
    %v647 = vadd.f32 0.0, %v646
    %648 = vdwg.mxu0
    %650 = vrot.lane.b32.xlu0 %v180, 112
    %v651 = vpop.permute.xlu0 %650
    %v654 = vsel %vm241, %v534, 0
    %656 = vmatpush.msra.mxu0 0.0
    %657 = vmatpush.msra.mxu0 0.0
    %658 = vmatpush.msra.mxu0 0.0
    %659 = vmatpush.msra.mxu0 0.0
    %660 = vmatpush.msra.mxu0 0.0
    %661 = vmatpush.msra.mxu0 0.0
    %662 = vmatpush.msra.mxu0 0.0
    %663 = vmatpush.msra.mxu0 0.0
    %664 = vmatpush.msra.mxu0 0.0
    %665 = vmatpush.msra.mxu0 0.0
    %666 = vmatpush.msra.mxu0 0.0
    %667 = vmatpush.msra.mxu0 0.0
    %668 = vmatpush.msra.mxu0 0.0
    %669 = vmatpush.msra.mxu0 0.0
    %670 = vmatpush.msra.mxu0 0.0
    %671 = vmatpush.msra.mxu0 %v651
    %672 = vmatmul.f32.gmra.mxu0 %v654
    %v673 = vpop.f32.mrf.mxu0
    %v674 = vadd.f32 0.0, %v673
    %675 = vdwg.mxu0
    %s676 = scalar_lea.vmem %s7, 16
    %v677 = vld [vmem:[%s676] sm:$0xff]
    %v678 = vld [vmem:[%s676 + $0x8] sm:$0xff]
    %v680 = vsel %vm189, %v647, 0
    %v683 = vsel %vm189, %v674, 0
    %685 = vmatpush.msra.mxu0 0.0
    %686 = vmatpush.msra.mxu0 0.0
    %687 = vmatpush.msra.mxu0 0.0
    %688 = vmatpush.msra.mxu0 0.0
    %689 = vmatpush.msra.mxu0 0.0
    %690 = vmatpush.msra.mxu0 0.0
    %691 = vmatpush.msra.mxu0 0.0
    %692 = vmatpush.msra.mxu0 0.0
    %693 = vmatpush.msra.mxu0 0.0
    %694 = vmatpush.msra.mxu0 0.0
    %695 = vmatpush.msra.mxu0 0.0
    %696 = vmatpush.msra.mxu0 0.0
    %697 = vmatpush.msra.mxu0 0.0
    %698 = vmatpush.msra.mxu0 0.0
    %699 = vmatpush.msra.mxu0 %v678
    %700 = vmatpush.msra.mxu0 %v677
    %701 = vmatmul.f32.gmra.mxu0 %v680
    %v702 = vpop.f32.mrf.mxu0
    %v703 = vadd.f32 0.0, %v702
    %704 = vmatmul.f32.gmra.mxu0 %v683
    %v705 = vpop.f32.mrf.mxu0
    %v706 = vadd.f32 0.0, %v705
    %707 = vdwg.mxu0
    %v709 = vsel %vm189, %v404, 0
    %v712 = vsel %vm189, %v427, 0
    %714 = vmatpush.msra.mxu0 0.0
    %715 = vmatpush.msra.mxu0 0.0
    %716 = vmatpush.msra.mxu0 0.0
    %717 = vmatpush.msra.mxu0 0.0
    %718 = vmatpush.msra.mxu0 0.0
    %719 = vmatpush.msra.mxu0 0.0
    %720 = vmatpush.msra.mxu0 0.0
    %721 = vmatpush.msra.mxu0 0.0
    %722 = vmatpush.msra.mxu0 0.0
    %723 = vmatpush.msra.mxu0 0.0
    %724 = vmatpush.msra.mxu0 0.0
    %725 = vmatpush.msra.mxu0 0.0
    %726 = vmatpush.msra.mxu0 0.0
    %727 = vmatpush.msra.mxu0 0.0
    %728 = vmatpush.msra.mxu0 %v430
    %729 = vmatpush.msra.mxu0 %v429
    %730 = vmatmul.f32.gmra.mxu0 %v709
    %v731 = vpop.f32.mrf.mxu0
    %v732 = vadd.f32 %v703, %v731
    %733 = vmatmul.f32.gmra.mxu0 %v712
    %v734 = vpop.f32.mrf.mxu0
    %v735 = vadd.f32 %v706, %v734
    %736 = vdwg.mxu0
    %737 = vrot.lane.b32.xlu0 %v154, 96
    %v738 = vpop.permute.xlu0 %737
    %739 = vrot.lane.b32.xlu0 %v154, 32
    %v740 = vpop.permute.xlu0 %739
    %v741 = vsel %vm189, %v738, 0
    %v743 = vsel %vm189, %v740, 0
    %745 = vmatpush.xpose.msra.mxu0 0.0
    %746 = vmatpush.xpose.msra.mxu0 0.0
    %747 = vmatpush.xpose.msra.mxu0 0.0
    %748 = vmatpush.xpose.msra.mxu0 0.0
    %749 = vmatpush.xpose.msra.mxu0 0.0
    %750 = vmatpush.xpose.msra.mxu0 0.0
    %751 = vmatpush.xpose.msra.mxu0 0.0
    %752 = vmatpush.xpose.msra.mxu0 0.0
    %753 = vmatpush.xpose.msra.mxu0 0.0
    %754 = vmatpush.xpose.msra.mxu0 0.0
    %755 = vmatpush.xpose.msra.mxu0 0.0
    %756 = vmatpush.xpose.msra.mxu0 0.0
    %757 = vmatpush.xpose.msra.mxu0 0.0
    %758 = vmatpush.xpose.msra.mxu0 0.0
    %759 = vmatpush.xpose.msra.mxu0 0.0
    %760 = vmatpush.xpose.msra.mxu0 %v743
    %761 = vmatmul.f32.gmra.mxu0 %v741
    %v762 = vpop.f32.mrf.mxu0
    %v763 = vadd.f32 %v184, %v762
    %764 = vdwg.mxu0
    %765 = vrot.lane.b32.xlu0 %v157, 96
    %v766 = vpop.permute.xlu0 %765
    %767 = vrot.lane.b32.xlu0 %v157, 32
    %v768 = vpop.permute.xlu0 %767
    %v769 = vsel %vm189, %v766, 0
    %v771 = vsel %vm189, %v768, 0
    %773 = vmatpush.xpose.msra.mxu0 0.0
    %774 = vmatpush.xpose.msra.mxu0 0.0
    %775 = vmatpush.xpose.msra.mxu0 0.0
    %776 = vmatpush.xpose.msra.mxu0 0.0
    %777 = vmatpush.xpose.msra.mxu0 0.0
    %778 = vmatpush.xpose.msra.mxu0 0.0
    %779 = vmatpush.xpose.msra.mxu0 0.0
    %780 = vmatpush.xpose.msra.mxu0 0.0
    %781 = vmatpush.xpose.msra.mxu0 0.0
    %782 = vmatpush.xpose.msra.mxu0 0.0
    %783 = vmatpush.xpose.msra.mxu0 0.0
    %784 = vmatpush.xpose.msra.mxu0 0.0
    %785 = vmatpush.xpose.msra.mxu0 0.0
    %786 = vmatpush.xpose.msra.mxu0 0.0
    %787 = vmatpush.xpose.msra.mxu0 0.0
    %788 = vmatpush.xpose.msra.mxu0 %v771
    %789 = vmatmul.f32.gmra.mxu0 %v769
    %v790 = vpop.f32.mrf.mxu0
    %v791 = vadd.f32 %v184, %v790
    %792 = vdwg.mxu0
    %v793 = vsel %vm241, %v763, -inf
    %794 = vmax.xlane.f32.xlu0 %v793
    %v795 = vpop.xlane.xlu0 %794
    %v796 = vsel %vm241, %v791, -inf
    %797 = vmax.xlane.f32.xlu0 %v796
    %v798 = vpop.xlane.xlu0 %797
    %v799 = vsub.f32 %v763, %v795
    %v800 = vsub.f32 %v791, %v798
    %v801 = vmul.f32 %v799, 1.442695
    %v802 = vpow.pop %v801
    %v803 = vmul.f32 %v800, 1.442695
    %v804 = vpow.pop %v803
    %v805 = vsel %vm241, %v802, 0.0
    %806 = vadd.xlane.f32.xlu0 %v805
    %v807 = vpop.xlane.xlu0 %806
    %v808 = vsel %vm241, %v804, 0.0
    %809 = vadd.xlane.f32.xlu0 %v808
    %v810 = vpop.xlane.xlu0 %809
    %v811 = vrcp.pop %v807
    %v812 = vmul.f32 %v807, %v811
    %v813 = vsub.f32 1.0, %v812
    %v814 = vmul.f32 %v811, %v813
    %v815 = vadd.f32 %v811, %v814
    %vm816 = vweird.f32 %v807
    %vm817 = vweird.f32 %v811
    %vm818 = vmor %vm816, %vm817
    %v819 = vsel %vm818, %v811, %v815
    %v820 = vand.u32 2147483647, %v807
    %vm821 = vcmp.eq.f32.partialorder %v820, 8.507059e+37
    %v822 = vand.u32 %v807, 2147483648
    %v823 = vor.u32 1.1754944e-38, %v822
    %v824 = vsel %vm821, %v823, %v819
    %v825 = vrcp.pop %v810
    %v826 = vmul.f32 %v810, %v825
    %v827 = vsub.f32 1.0, %v826
    %v828 = vmul.f32 %v825, %v827
    %v829 = vadd.f32 %v825, %v828
    %vm830 = vweird.f32 %v810
    %vm831 = vweird.f32 %v825
    %vm832 = vmor %vm830, %vm831
    %v833 = vsel %vm832, %v825, %v829
    %v834 = vand.u32 2147483647, %v810
    %vm835 = vcmp.eq.f32.partialorder %v834, 8.507059e+37
    %v836 = vand.u32 %v810, 2147483648
    %v837 = vor.u32 1.1754944e-38, %v836
    %v838 = vsel %vm835, %v837, %v833
    %v839 = vmul.f32 %v802, %v824
    %v840 = vmul.f32 %v804, %v838
    %v841 = vrot.slane %v839, 4
    %v842 = vsel %vm291, 0.0, %v841
    %v844 = vunpack.c.l.s4 1983009808
    %v845 = vunpack.c.0.s8 %v844
    %v846 = vperm.slane %v839, %v845
    %v848 = vunpack.c.l.s4 1983009808
    %v849 = vunpack.c.0.s8 %v848
    %v850 = vperm.slane %v842, %v849
    %v851 = vrot.slane %v840, 4
    %v852 = vsel %vm291, 0.0, %v851
    %v854 = vunpack.c.l.s4 1983009808
    %v855 = vunpack.c.0.s8 %v854
    %v856 = vperm.slane %v840, %v855
    %v858 = vunpack.c.l.s4 1983009808
    %v859 = vunpack.c.0.s8 %v858
    %v860 = vperm.slane %v852, %v859
    %v861 = vrot.slane %v856, 4
    %v862 = vsel %vm291, %v861, %v846
    %v863 = vrot.slane %v846, 4
    %v864 = vsel %vm291, %v856, %v863
    %v866 = vunpack.c.l.s4 1934713408
    %v867 = vunpack.c.0.s8 %v866
    %v868 = vperm.slane %v862, %v867
    %v870 = vunpack.c.l.s4 1934713408
    %v871 = vunpack.c.0.s8 %v870
    %v872 = vperm.slane %v864, %v871
    %v873 = vrot.slane %v860, 4
    %v874 = vsel %vm291, %v873, %v850
    %v875 = vrot.slane %v850, 4
    %v876 = vsel %vm291, %v860, %v875
    %v878 = vunpack.c.l.s4 1934713408
    %v879 = vunpack.c.0.s8 %v878
    %v880 = vperm.slane %v874, %v879
    %v882 = vunpack.c.l.s4 1934713408
    %v883 = vunpack.c.0.s8 %v882
    %v884 = vperm.slane %v876, %v883
    %v885 = vrot.slane %v868, 4
    %v886 = vsel %vm291, 0.0, %v885
    %v887 = vrot.slane %v872, 4
    %v888 = vsel %vm291, 0.0, %v887
    %v889 = vrot.slane %v880, 4
    %v890 = vsel %vm291, 0.0, %v889
    %v891 = vrot.slane %v884, 4
    %v892 = vsel %vm291, 0.0, %v891
    %894 = vrot.lane.b32.xlu0 %v886, 8
    %v895 = vpop.permute.xlu0 %894
    %898 = vrot.lane.b32.xlu0 %v872, 16
    %v899 = vpop.permute.xlu0 %898
    %902 = vrot.lane.b32.xlu0 %v888, 24
    %v903 = vpop.permute.xlu0 %902
    %906 = vrot.lane.b32.xlu0 %v880, 32
    %v907 = vpop.permute.xlu0 %906
    %910 = vrot.lane.b32.xlu0 %v890, 40
    %v911 = vpop.permute.xlu0 %910
    %914 = vrot.lane.b32.xlu0 %v884, 48
    %v915 = vpop.permute.xlu0 %914
    %918 = vrot.lane.b32.xlu0 %v892, 56
    %v919 = vpop.permute.xlu0 %918
    %v921 = vsel %vm241, %v868, %v895
    %v922 = vsel %vm189, %v921, %v899
    %v923 = vsel %vm373, %v922, %v903
    %v924 = vsel %vm375, %v923, %v907
    %v925 = vsel %vm377, %v924, %v911
    %v926 = vsel %vm379, %v925, %v915
    %v927 = vsel %vm381, %v926, %v919
    %928 = vrot.lane.b32.xlu0 %v177, 96
    %v929 = vpop.permute.xlu0 %928
    %v932 = vsel %vm241, %v839, 0
    %934 = vmatpush.msra.mxu0 0.0
    %935 = vmatpush.msra.mxu0 0.0
    %936 = vmatpush.msra.mxu0 0.0
    %937 = vmatpush.msra.mxu0 0.0
    %938 = vmatpush.msra.mxu0 0.0
    %939 = vmatpush.msra.mxu0 0.0
    %940 = vmatpush.msra.mxu0 0.0
    %941 = vmatpush.msra.mxu0 0.0
    %942 = vmatpush.msra.mxu0 0.0
    %943 = vmatpush.msra.mxu0 0.0
    %944 = vmatpush.msra.mxu0 0.0
    %945 = vmatpush.msra.mxu0 0.0
    %946 = vmatpush.msra.mxu0 0.0
    %947 = vmatpush.msra.mxu0 0.0
    %948 = vmatpush.msra.mxu0 0.0
    %949 = vmatpush.msra.mxu0 %v929
    %950 = vmatmul.f32.gmra.mxu0 %v932
    %v951 = vpop.f32.mrf.mxu0
    %v952 = vadd.f32 0.0, %v951
    %953 = vdwg.mxu0
    %954 = vrot.lane.b32.xlu0 %v180, 96
    %v955 = vpop.permute.xlu0 %954
    %v958 = vsel %vm241, %v840, 0
    %960 = vmatpush.msra.mxu0 0.0
    %961 = vmatpush.msra.mxu0 0.0
    %962 = vmatpush.msra.mxu0 0.0
    %963 = vmatpush.msra.mxu0 0.0
    %964 = vmatpush.msra.mxu0 0.0
    %965 = vmatpush.msra.mxu0 0.0
    %966 = vmatpush.msra.mxu0 0.0
    %967 = vmatpush.msra.mxu0 0.0
    %968 = vmatpush.msra.mxu0 0.0
    %969 = vmatpush.msra.mxu0 0.0
    %970 = vmatpush.msra.mxu0 0.0
    %971 = vmatpush.msra.mxu0 0.0
    %972 = vmatpush.msra.mxu0 0.0
    %973 = vmatpush.msra.mxu0 0.0
    %974 = vmatpush.msra.mxu0 0.0
    %975 = vmatpush.msra.mxu0 %v955
    %976 = vmatmul.f32.gmra.mxu0 %v958
    %v977 = vpop.f32.mrf.mxu0
    %v978 = vadd.f32 0.0, %v977
    %979 = vdwg.mxu0
    %s980 = scalar_lea.vmem %s7, 32
    %v981 = vld [vmem:[%s980] sm:$0xff]
    %v982 = vld [vmem:[%s980 + $0x8] sm:$0xff]
    %v984 = vsel %vm189, %v952, 0
    %v987 = vsel %vm189, %v978, 0
    %989 = vmatpush.msra.mxu0 0.0
    %990 = vmatpush.msra.mxu0 0.0
    %991 = vmatpush.msra.mxu0 0.0
    %992 = vmatpush.msra.mxu0 0.0
    %993 = vmatpush.msra.mxu0 0.0
    %994 = vmatpush.msra.mxu0 0.0
    %995 = vmatpush.msra.mxu0 0.0
    %996 = vmatpush.msra.mxu0 0.0
    %997 = vmatpush.msra.mxu0 0.0
    %998 = vmatpush.msra.mxu0 0.0
    %999 = vmatpush.msra.mxu0 0.0
    %1000 = vmatpush.msra.mxu0 0.0
    %1001 = vmatpush.msra.mxu0 0.0
    %1002 = vmatpush.msra.mxu0 0.0
    %1003 = vmatpush.msra.mxu0 %v982
    %1004 = vmatpush.msra.mxu0 %v981
    %1005 = vmatmul.f32.gmra.mxu0 %v984
    %v1006 = vpop.f32.mrf.mxu0
    %v1007 = vadd.f32 0.0, %v1006
    %1008 = vmatmul.f32.gmra.mxu0 %v987
    %v1009 = vpop.f32.mrf.mxu0
    %v1010 = vadd.f32 0.0, %v1009
    %1011 = vdwg.mxu0
    %v1012 = vadd.f32 %v732, %v1007
    %v1013 = vadd.f32 %v735, %v1010
    %1014 = vrot.lane.b32.xlu0 %v154, 80
    %v1015 = vpop.permute.xlu0 %1014
    %1016 = vrot.lane.b32.xlu0 %v154, 16
    %v1017 = vpop.permute.xlu0 %1016
    %v1018 = vsel %vm189, %v1015, 0
    %v1020 = vsel %vm189, %v1017, 0
    %1022 = vmatpush.xpose.msra.mxu0 0.0
    %1023 = vmatpush.xpose.msra.mxu0 0.0
    %1024 = vmatpush.xpose.msra.mxu0 0.0
    %1025 = vmatpush.xpose.msra.mxu0 0.0
    %1026 = vmatpush.xpose.msra.mxu0 0.0
    %1027 = vmatpush.xpose.msra.mxu0 0.0
    %1028 = vmatpush.xpose.msra.mxu0 0.0
    %1029 = vmatpush.xpose.msra.mxu0 0.0
    %1030 = vmatpush.xpose.msra.mxu0 0.0
    %1031 = vmatpush.xpose.msra.mxu0 0.0
    %1032 = vmatpush.xpose.msra.mxu0 0.0
    %1033 = vmatpush.xpose.msra.mxu0 0.0
    %1034 = vmatpush.xpose.msra.mxu0 0.0
    %1035 = vmatpush.xpose.msra.mxu0 0.0
    %1036 = vmatpush.xpose.msra.mxu0 0.0
    %1037 = vmatpush.xpose.msra.mxu0 %v1020
    %1038 = vmatmul.f32.gmra.mxu0 %v1018
    %v1039 = vpop.f32.mrf.mxu0
    %v1040 = vadd.f32 %v185, %v1039
    %1041 = vdwg.mxu0
    %1042 = vrot.lane.b32.xlu0 %v157, 80
    %v1043 = vpop.permute.xlu0 %1042
    %1044 = vrot.lane.b32.xlu0 %v157, 16
    %v1045 = vpop.permute.xlu0 %1044
    %v1046 = vsel %vm189, %v1043, 0
    %v1048 = vsel %vm189, %v1045, 0
    %1050 = vmatpush.xpose.msra.mxu0 0.0
    %1051 = vmatpush.xpose.msra.mxu0 0.0
    %1052 = vmatpush.xpose.msra.mxu0 0.0
    %1053 = vmatpush.xpose.msra.mxu0 0.0
    %1054 = vmatpush.xpose.msra.mxu0 0.0
    %1055 = vmatpush.xpose.msra.mxu0 0.0
    %1056 = vmatpush.xpose.msra.mxu0 0.0
    %1057 = vmatpush.xpose.msra.mxu0 0.0
    %1058 = vmatpush.xpose.msra.mxu0 0.0
    %1059 = vmatpush.xpose.msra.mxu0 0.0
    %1060 = vmatpush.xpose.msra.mxu0 0.0
    %1061 = vmatpush.xpose.msra.mxu0 0.0
    %1062 = vmatpush.xpose.msra.mxu0 0.0
    %1063 = vmatpush.xpose.msra.mxu0 0.0
    %1064 = vmatpush.xpose.msra.mxu0 0.0
    %1065 = vmatpush.xpose.msra.mxu0 %v1048
    %1066 = vmatmul.f32.gmra.mxu0 %v1046
    %v1067 = vpop.f32.mrf.mxu0
    %v1068 = vadd.f32 %v185, %v1067
    %1069 = vdwg.mxu0
    %v1070 = vsel %vm241, %v1040, -inf
    %1071 = vmax.xlane.f32.xlu0 %v1070
    %v1072 = vpop.xlane.xlu0 %1071
    %v1073 = vsel %vm241, %v1068, -inf
    %1074 = vmax.xlane.f32.xlu0 %v1073
    %v1075 = vpop.xlane.xlu0 %1074
    %v1076 = vsub.f32 %v1040, %v1072
    %v1077 = vsub.f32 %v1068, %v1075
    %v1078 = vmul.f32 %v1076, 1.442695
    %v1079 = vpow.pop %v1078
    %v1080 = vmul.f32 %v1077, 1.442695
    %v1081 = vpow.pop %v1080
    %v1082 = vsel %vm241, %v1079, 0.0
    %1083 = vadd.xlane.f32.xlu0 %v1082
    %v1084 = vpop.xlane.xlu0 %1083
    %v1085 = vsel %vm241, %v1081, 0.0
    %1086 = vadd.xlane.f32.xlu0 %v1085
    %v1087 = vpop.xlane.xlu0 %1086
    %v1088 = vrcp.pop %v1084
    %v1089 = vmul.f32 %v1084, %v1088
    %v1090 = vsub.f32 1.0, %v1089
    %v1091 = vmul.f32 %v1088, %v1090
    %v1092 = vadd.f32 %v1088, %v1091
    %vm1093 = vweird.f32 %v1084
    %vm1094 = vweird.f32 %v1088
    %vm1095 = vmor %vm1093, %vm1094
    %v1096 = vsel %vm1095, %v1088, %v1092
    %v1097 = vand.u32 2147483647, %v1084
    %vm1098 = vcmp.eq.f32.partialorder %v1097, 8.507059e+37
    %v1099 = vand.u32 %v1084, 2147483648
    %v1100 = vor.u32 1.1754944e-38, %v1099
    %v1101 = vsel %vm1098, %v1100, %v1096
    %v1102 = vrcp.pop %v1087
    %v1103 = vmul.f32 %v1087, %v1102
    %v1104 = vsub.f32 1.0, %v1103
    %v1105 = vmul.f32 %v1102, %v1104
    %v1106 = vadd.f32 %v1102, %v1105
    %vm1107 = vweird.f32 %v1087
    %vm1108 = vweird.f32 %v1102
    %vm1109 = vmor %vm1107, %vm1108
    %v1110 = vsel %vm1109, %v1102, %v1106
    %v1111 = vand.u32 2147483647, %v1087
    %vm1112 = vcmp.eq.f32.partialorder %v1111, 8.507059e+37
    %v1113 = vand.u32 %v1087, 2147483648
    %v1114 = vor.u32 1.1754944e-38, %v1113
    %v1115 = vsel %vm1112, %v1114, %v1110
    %v1116 = vmul.f32 %v1079, %v1101
    %v1117 = vmul.f32 %v1081, %v1115
    %v1118 = vrot.slane %v1116, 4
    %v1119 = vsel %vm291, 0.0, %v1118
    %v1121 = vunpack.c.l.s4 1983009808
    %v1122 = vunpack.c.0.s8 %v1121
    %v1123 = vperm.slane %v1116, %v1122
    %v1125 = vunpack.c.l.s4 1983009808
    %v1126 = vunpack.c.0.s8 %v1125
    %v1127 = vperm.slane %v1119, %v1126
    %v1128 = vrot.slane %v1117, 4
    %v1129 = vsel %vm291, 0.0, %v1128
    %v1131 = vunpack.c.l.s4 1983009808
    %v1132 = vunpack.c.0.s8 %v1131
    %v1133 = vperm.slane %v1117, %v1132
    %v1135 = vunpack.c.l.s4 1983009808
    %v1136 = vunpack.c.0.s8 %v1135
    %v1137 = vperm.slane %v1129, %v1136
    %v1138 = vrot.slane %v1133, 4
    %v1139 = vsel %vm291, %v1138, %v1123
    %v1140 = vrot.slane %v1123, 4
    %v1141 = vsel %vm291, %v1133, %v1140
    %v1143 = vunpack.c.l.s4 1934713408
    %v1144 = vunpack.c.0.s8 %v1143
    %v1145 = vperm.slane %v1139, %v1144
    %v1147 = vunpack.c.l.s4 1934713408
    %v1148 = vunpack.c.0.s8 %v1147
    %v1149 = vperm.slane %v1141, %v1148
    %v1150 = vrot.slane %v1137, 4
    %v1151 = vsel %vm291, %v1150, %v1127
    %v1152 = vrot.slane %v1127, 4
    %v1153 = vsel %vm291, %v1137, %v1152
    %v1155 = vunpack.c.l.s4 1934713408
    %v1156 = vunpack.c.0.s8 %v1155
    %v1157 = vperm.slane %v1151, %v1156
    %v1159 = vunpack.c.l.s4 1934713408
    %v1160 = vunpack.c.0.s8 %v1159
    %v1161 = vperm.slane %v1153, %v1160
    %v1162 = vrot.slane %v1145, 4
    %v1163 = vsel %vm291, 0.0, %v1162
    %v1164 = vrot.slane %v1149, 4
    %v1165 = vsel %vm291, 0.0, %v1164
    %v1166 = vrot.slane %v1157, 4
    %v1167 = vsel %vm291, 0.0, %v1166
    %v1168 = vrot.slane %v1161, 4
    %v1169 = vsel %vm291, 0.0, %v1168
    %1171 = vrot.lane.b32.xlu0 %v1163, 8
    %v1172 = vpop.permute.xlu0 %1171
    %1175 = vrot.lane.b32.xlu0 %v1149, 16
    %v1176 = vpop.permute.xlu0 %1175
    %1179 = vrot.lane.b32.xlu0 %v1165, 24
    %v1180 = vpop.permute.xlu0 %1179
    %1183 = vrot.lane.b32.xlu0 %v1157, 32
    %v1184 = vpop.permute.xlu0 %1183
    %1187 = vrot.lane.b32.xlu0 %v1167, 40
    %v1188 = vpop.permute.xlu0 %1187
    %1191 = vrot.lane.b32.xlu0 %v1161, 48
    %v1192 = vpop.permute.xlu0 %1191
    %1195 = vrot.lane.b32.xlu0 %v1169, 56
    %v1196 = vpop.permute.xlu0 %1195
    %v1198 = vsel %vm241, %v1145, %v1172
    %v1199 = vsel %vm189, %v1198, %v1176
    %v1200 = vsel %vm373, %v1199, %v1180
    %v1201 = vsel %vm375, %v1200, %v1184
    %v1202 = vsel %vm377, %v1201, %v1188
    %v1203 = vsel %vm379, %v1202, %v1192
    %v1204 = vsel %vm381, %v1203, %v1196
    %1205 = vrot.lane.b32.xlu0 %v177, 80
    %v1206 = vpop.permute.xlu0 %1205
    %v1209 = vsel %vm241, %v1116, 0
    %1211 = vmatpush.msra.mxu0 0.0
    %1212 = vmatpush.msra.mxu0 0.0
    %1213 = vmatpush.msra.mxu0 0.0
    %1214 = vmatpush.msra.mxu0 0.0
    %1215 = vmatpush.msra.mxu0 0.0
    %1216 = vmatpush.msra.mxu0 0.0
    %1217 = vmatpush.msra.mxu0 0.0
    %1218 = vmatpush.msra.mxu0 0.0
    %1219 = vmatpush.msra.mxu0 0.0
    %1220 = vmatpush.msra.mxu0 0.0
    %1221 = vmatpush.msra.mxu0 0.0
    %1222 = vmatpush.msra.mxu0 0.0
    %1223 = vmatpush.msra.mxu0 0.0
    %1224 = vmatpush.msra.mxu0 0.0
    %1225 = vmatpush.msra.mxu0 0.0
    %1226 = vmatpush.msra.mxu0 %v1206
    %1227 = vmatmul.f32.gmra.mxu0 %v1209
    %v1228 = vpop.f32.mrf.mxu0
    %v1229 = vadd.f32 0.0, %v1228
    %1230 = vdwg.mxu0
    %1231 = vrot.lane.b32.xlu0 %v180, 80
    %v1232 = vpop.permute.xlu0 %1231
    %v1235 = vsel %vm241, %v1117, 0
    %1237 = vmatpush.msra.mxu0 0.0
    %1238 = vmatpush.msra.mxu0 0.0
    %1239 = vmatpush.msra.mxu0 0.0
    %1240 = vmatpush.msra.mxu0 0.0
    %1241 = vmatpush.msra.mxu0 0.0
    %1242 = vmatpush.msra.mxu0 0.0
    %1243 = vmatpush.msra.mxu0 0.0
    %1244 = vmatpush.msra.mxu0 0.0
    %1245 = vmatpush.msra.mxu0 0.0
    %1246 = vmatpush.msra.mxu0 0.0
    %1247 = vmatpush.msra.mxu0 0.0
    %1248 = vmatpush.msra.mxu0 0.0
    %1249 = vmatpush.msra.mxu0 0.0
    %1250 = vmatpush.msra.mxu0 0.0
    %1251 = vmatpush.msra.mxu0 0.0
    %1252 = vmatpush.msra.mxu0 %v1232
    %1253 = vmatmul.f32.gmra.mxu0 %v1235
    %v1254 = vpop.f32.mrf.mxu0
    %v1255 = vadd.f32 0.0, %v1254
    %1256 = vdwg.mxu0
    %s1257 = scalar_lea.vmem %s7, 48
    %v1258 = vld [vmem:[%s1257] sm:$0xff]
    %v1259 = vld [vmem:[%s1257 + $0x8] sm:$0xff]
    %v1261 = vsel %vm189, %v1229, 0
    %v1264 = vsel %vm189, %v1255, 0
    %1266 = vmatpush.msra.mxu0 0.0
    %1267 = vmatpush.msra.mxu0 0.0
    %1268 = vmatpush.msra.mxu0 0.0
    %1269 = vmatpush.msra.mxu0 0.0
    %1270 = vmatpush.msra.mxu0 0.0
    %1271 = vmatpush.msra.mxu0 0.0
    %1272 = vmatpush.msra.mxu0 0.0
    %1273 = vmatpush.msra.mxu0 0.0
    %1274 = vmatpush.msra.mxu0 0.0
    %1275 = vmatpush.msra.mxu0 0.0
    %1276 = vmatpush.msra.mxu0 0.0
    %1277 = vmatpush.msra.mxu0 0.0
    %1278 = vmatpush.msra.mxu0 0.0
    %1279 = vmatpush.msra.mxu0 0.0
    %1280 = vmatpush.msra.mxu0 %v1259
    %1281 = vmatpush.msra.mxu0 %v1258
    %1282 = vmatmul.f32.gmra.mxu0 %v1261
    %v1283 = vpop.f32.mrf.mxu0
    %v1284 = vadd.f32 0.0, %v1283
    %1285 = vmatmul.f32.gmra.mxu0 %v1264
    %v1286 = vpop.f32.mrf.mxu0
    %v1287 = vadd.f32 0.0, %v1286
    %1288 = vdwg.mxu0
    %v1289 = vadd.f32 %v1012, %v1284
    %v1290 = vadd.f32 %v1013, %v1287
    %v1291 = vld [vmem:[%s8] sm:$0x1]
    %v1293 = vperm.slane %v1291, 0
    %v1295 = vadd.f32 %v1289, %v1293
    %v1296 = vadd.f32 %v1290, %v1293
    %1298 = vrot.lane.b32.xlu0 %v621, 64
    %v1299 = vpop.permute.xlu0 %1298
    %1302 = vrot.lane.b32.xlu0 %v1204, 64
    %v1303 = vpop.permute.xlu0 %1302
    %v1305 = vsel %vm52, %v382, %v1299
    %v1306 = vsel %vm52, %v927, %v1303
    %v1309 = vrot.slane %v1306, 6
    %vm1310 = vcmask 1041408
    %v1311 = vsel %vm1310, %v1305, %v1309
    %1313 = vst [vmem:[#allocation4] sm:$0xf] %v1311
    %v1314 = vadd.f32 %v48, %v1295
    %v1315 = vadd.f32 %v49, %v1296
    %v1316 = vld [vmem:[%s4] sm:$0x1]
    %v1317 = vld [vmem:[%s5] sm:$0x1]
    %v1318 = vsel %vm52, %v1314, 0.0
    %1319 = vadd.xlane.f32.xlu0 %v1318
    %v1320 = vpop.xlane.xlu0 %1319
    %v1321 = vsel %vm52, %v1315, 0.0
    %1322 = vadd.xlane.f32.xlu0 %v1321
    %v1323 = vpop.xlane.xlu0 %1322
    %v1324 = vmul.f32 %v1320, %v65
    %v1325 = vmul.f32 %v1323, %v65
    %v1326 = vsub.f32 %v1314, %v1324
    %v1327 = vsub.f32 %v1315, %v1325
    %v1328 = vmul.f32 %v1326, %v1326
    %v1329 = vmul.f32 %v1327, %v1327
    %v1330 = vsel %vm52, %v1328, 0.0
    %1331 = vadd.xlane.f32.xlu0 %v1330
    %v1332 = vpop.xlane.xlu0 %1331
    %v1333 = vsel %vm52, %v1329, 0.0
    %1334 = vadd.xlane.f32.xlu0 %v1333
    %v1335 = vpop.xlane.xlu0 %1334
    %v1336 = vmul.f32 %v1332, %v65
    %v1337 = vmul.f32 %v1335, %v65
    %v1338 = vadd.f32 %v1336, 1e-05
    %v1339 = vadd.f32 %v1337, 1e-05
    %v1340 = vrsqrt.pop %v1338
    %v1341 = vmul.f32 %v1340, %v1338
    %v1342 = vmul.f32 %v1341, %v1340
    %v1343 = vmul.f32 0.5, %v1342
    %v1344 = vsub.f32 1.5, %v1343
    %v1345 = vmul.f32 %v1340, %v1344
    %vm1346 = vweird.f32 %v1338
    %vm1347 = vweird.f32 %v1340
    %vm1348 = vmor %vm1346, %vm1347
    %v1349 = vsel %vm1348, %v1340, %v1345
    %v1350 = vrsqrt.pop %v1339
    %v1351 = vmul.f32 %v1350, %v1339
    %v1352 = vmul.f32 %v1351, %v1350
    %v1353 = vmul.f32 0.5, %v1352
    %v1354 = vsub.f32 1.5, %v1353
    %v1355 = vmul.f32 %v1350, %v1354
    %vm1356 = vweird.f32 %v1339
    %vm1357 = vweird.f32 %v1350
    %vm1358 = vmor %vm1356, %vm1357
    %v1359 = vsel %vm1358, %v1350, %v1355
    %v1360 = vmul.f32 %v1326, %v1349
    %v1361 = vmul.f32 %v1327, %v1359
    %v1363 = vperm.slane %v1316, 0
    %v1365 = vmul.f32 %v1360, %v1363
    %v1366 = vmul.f32 %v1361, %v1363
    %v1368 = vperm.slane %v1317, 0
    %v1370 = vadd.f32 %v1365, %v1368
    %v1371 = vadd.f32 %v1366, %v1368
    %v1372 = vld [vmem:[%s9] sm:$0xff]
    %v1373 = vld [vmem:[%s9 + $0x8] sm:$0xff]
    %v1374 = vld [vmem:[%s9 + $0x10] sm:$0xff]
    %v1375 = vld [vmem:[%s9 + $0x18] sm:$0xff]
    %v1376 = vld [vmem:[%s9 + $0x20] sm:$0xff]
    %v1377 = vld [vmem:[%s9 + $0x28] sm:$0xff]
    %v1378 = vld [vmem:[%s9 + $0x30] sm:$0xff]
    %v1379 = vld [vmem:[%s9 + $0x38] sm:$0xff]
    %v1380 = vld [vmem:[%s9 + $0x40] sm:$0xff]
    %v1381 = vld [vmem:[%s9 + $0x48] sm:$0xff]
    %v1382 = vld [vmem:[%s9 + $0x50] sm:$0xff]
    %v1383 = vld [vmem:[%s9 + $0x58] sm:$0xff]
    %v1384 = vld [vmem:[%s9 + $0x60] sm:$0xff]
    %v1385 = vld [vmem:[%s9 + $0x68] sm:$0xff]
    %v1386 = vld [vmem:[%s9 + $0x70] sm:$0xff]
    %v1387 = vld [vmem:[%s9 + $0x78] sm:$0xff]
    %v1388 = vld [vmem:[%s10] sm:$0x3]
    %v1390 = vperm.slane %v1388, 0
    %v1391 = vperm.slane %v1388, 1
    %v1395 = vsel %vm52, %v1370, 0
    %v1398 = vsel %vm52, %v1371, 0
    %1400 = vmatpush.msra.mxu0 0.0
    %1401 = vmatpush.msra.mxu0 0.0
    %1402 = vmatpush.msra.mxu0 0.0
    %1403 = vmatpush.msra.mxu0 0.0
    %1404 = vmatpush.msra.mxu0 0.0
    %1405 = vmatpush.msra.mxu0 0.0
    %1406 = vmatpush.msra.mxu0 0.0
    %1407 = vmatpush.msra.mxu0 0.0
    %1408 = vmatpush.msra.mxu0 %v1386
    %1409 = vmatpush.msra.mxu0 %v1384
    %1410 = vmatpush.msra.mxu0 %v1382
    %1411 = vmatpush.msra.mxu0 %v1380
    %1412 = vmatpush.msra.mxu0 %v1378
    %1413 = vmatpush.msra.mxu0 %v1376
    %1414 = vmatpush.msra.mxu0 %v1374
    %1415 = vmatpush.msra.mxu0 %v1372
    %1416 = vmatmul.f32.gmra.mxu0 %v1395
    %v1417 = vpop.f32.mrf.mxu0
    %v1418 = vadd.f32 %v1390, %v1417
    %1419 = vmatmul.f32.gmra.mxu0 %v1398
    %v1420 = vpop.f32.mrf.mxu0
    %v1421 = vadd.f32 %v1390, %v1420
    %1422 = vdwg.mxu0
    %1423 = vmatpush.msra.mxu0 0.0
    %1424 = vmatpush.msra.mxu0 0.0
    %1425 = vmatpush.msra.mxu0 0.0
    %1426 = vmatpush.msra.mxu0 0.0
    %1427 = vmatpush.msra.mxu0 0.0
    %1428 = vmatpush.msra.mxu0 0.0
    %1429 = vmatpush.msra.mxu0 0.0
    %1430 = vmatpush.msra.mxu0 0.0
    %1431 = vmatpush.msra.mxu0 %v1387
    %1432 = vmatpush.msra.mxu0 %v1385
    %1433 = vmatpush.msra.mxu0 %v1383
    %1434 = vmatpush.msra.mxu0 %v1381
    %1435 = vmatpush.msra.mxu0 %v1379
    %1436 = vmatpush.msra.mxu0 %v1377
    %1437 = vmatpush.msra.mxu0 %v1375
    %1438 = vmatpush.msra.mxu0 %v1373
    %1439 = vmatmul.f32.gmra.mxu0 %v1395
    %v1440 = vpop.f32.mrf.mxu0
    %v1441 = vadd.f32 %v1391, %v1440
    %1442 = vmatmul.f32.gmra.mxu0 %v1398
    %v1443 = vpop.f32.mrf.mxu0
    %v1444 = vadd.f32 %v1391, %v1443
    %1445 = vdwg.mxu0
    %v1446 = vmax.f32 %v1418, 0.0
    %v1447 = vmax.f32 %v1441, 0.0
    %v1448 = vmax.f32 %v1421, 0.0
    %v1449 = vmax.f32 %v1444, 0.0
    %v1450 = vld [vmem:[%s11] sm:$0xff]
    %v1451 = vld [vmem:[%s11 + $0x8] sm:$0xff]
    %v1452 = vld [vmem:[%s11 + $0x10] sm:$0xff]
    %v1453 = vld [vmem:[%s11 + $0x18] sm:$0xff]
    %v1454 = vld [vmem:[%s11 + $0x20] sm:$0xff]
    %v1455 = vld [vmem:[%s11 + $0x28] sm:$0xff]
    %v1456 = vld [vmem:[%s11 + $0x30] sm:$0xff]
    %v1457 = vld [vmem:[%s11 + $0x38] sm:$0xff]
    %v1458 = vld [vmem:[%s11 + $0x40] sm:$0xff]
    %v1459 = vld [vmem:[%s11 + $0x48] sm:$0xff]
    %v1460 = vld [vmem:[%s11 + $0x50] sm:$0xff]
    %v1461 = vld [vmem:[%s11 + $0x58] sm:$0xff]
    %v1462 = vld [vmem:[%s11 + $0x60] sm:$0xff]
    %v1463 = vld [vmem:[%s11 + $0x68] sm:$0xff]
    %v1464 = vld [vmem:[%s11 + $0x70] sm:$0xff]
    %v1465 = vld [vmem:[%s11 + $0x78] sm:$0xff]
    %v1466 = vld [vmem:[%s11 + $0x80] sm:$0xff]
    %v1467 = vld [vmem:[%s11 + $0x88] sm:$0xff]
    %v1468 = vld [vmem:[%s11 + $0x90] sm:$0xff]
    %v1469 = vld [vmem:[%s11 + $0x98] sm:$0xff]
    %v1470 = vld [vmem:[%s11 + $0xa0] sm:$0xff]
    %v1471 = vld [vmem:[%s11 + $0xa8] sm:$0xff]
    %v1472 = vld [vmem:[%s11 + $0xb0] sm:$0xff]
    %v1473 = vld [vmem:[%s11 + $0xb8] sm:$0xff]
    %v1474 = vld [vmem:[%s11 + $0xc0] sm:$0xff]
    %v1475 = vld [vmem:[%s11 + $0xc8] sm:$0xff]
    %v1476 = vld [vmem:[%s11 + $0xd0] sm:$0xff]
    %v1477 = vld [vmem:[%s11 + $0xd8] sm:$0xff]
    %v1478 = vld [vmem:[%s11 + $0xe0] sm:$0xff]
    %v1479 = vld [vmem:[%s11 + $0xe8] sm:$0xff]
    %v1480 = vld [vmem:[%s11 + $0xf0] sm:$0xff]
    %v1481 = vld [vmem:[%s11 + $0xf8] sm:$0xff]
    %v1482 = vld [vmem:[%s12] sm:$0x1]
    %v1484 = vperm.slane %v1482, 0
    %1486 = vmatpush.msra.mxu0 %v1465
    %1487 = vmatpush.msra.mxu0 %v1464
    %1488 = vmatpush.msra.mxu0 %v1463
    %1489 = vmatpush.msra.mxu0 %v1462
    %1490 = vmatpush.msra.mxu0 %v1461
    %1491 = vmatpush.msra.mxu0 %v1460
    %1492 = vmatpush.msra.mxu0 %v1459
    %1493 = vmatpush.msra.mxu0 %v1458
    %1494 = vmatpush.msra.mxu0 %v1457
    %1495 = vmatpush.msra.mxu0 %v1456
    %1496 = vmatpush.msra.mxu0 %v1455
    %1497 = vmatpush.msra.mxu0 %v1454
    %1498 = vmatpush.msra.mxu0 %v1453
    %1499 = vmatpush.msra.mxu0 %v1452
    %1500 = vmatpush.msra.mxu0 %v1451
    %1501 = vmatpush.msra.mxu0 %v1450
    %1502 = vmatmul.f32.gmra.mxu0 %v1446
    %v1503 = vpop.f32.mrf.mxu0
    %v1504 = vadd.f32 %v1484, %v1503
    %1505 = vmatmul.f32.gmra.mxu0 %v1448
    %v1506 = vpop.f32.mrf.mxu0
    %v1507 = vadd.f32 %v1484, %v1506
    %1508 = vdwg.mxu0
    %1509 = vmatpush.msra.mxu0 %v1481
    %1510 = vmatpush.msra.mxu0 %v1480
    %1511 = vmatpush.msra.mxu0 %v1479
    %1512 = vmatpush.msra.mxu0 %v1478
    %1513 = vmatpush.msra.mxu0 %v1477
    %1514 = vmatpush.msra.mxu0 %v1476
    %1515 = vmatpush.msra.mxu0 %v1475
    %1516 = vmatpush.msra.mxu0 %v1474
    %1517 = vmatpush.msra.mxu0 %v1473
    %1518 = vmatpush.msra.mxu0 %v1472
    %1519 = vmatpush.msra.mxu0 %v1471
    %1520 = vmatpush.msra.mxu0 %v1470
    %1521 = vmatpush.msra.mxu0 %v1469
    %1522 = vmatpush.msra.mxu0 %v1468
    %1523 = vmatpush.msra.mxu0 %v1467
    %1524 = vmatpush.msra.mxu0 %v1466
    %1525 = vmatmul.f32.gmra.mxu0 %v1447
    %v1526 = vpop.f32.mrf.mxu0
    %v1527 = vadd.f32 %v1504, %v1526
    %1528 = vmatmul.f32.gmra.mxu0 %v1449
    %v1529 = vpop.f32.mrf.mxu0
    %v1530 = vadd.f32 %v1507, %v1529
    %1531 = vdwg.mxu0
    %v1532 = vadd.f32 %v1314, %v1527
    %v1533 = vadd.f32 %v1315, %v1530
    %1534 = vst.msk [vmem:[#allocation2] sm:$0xff] %vm52, %v1532
    %1535 = vst.msk [vmem:[#allocation2 + $0x8] sm:$0xff] %vm52, %v1533
    // Predicated region
    $region54: #{tpu_custom_call.1} parent=1 // pred_check
      _
    $region55: #{tpu_custom_call.1} parent=1 // pred_check_branch
      %1537 = sbr.rel (0) target = $region57
    $region56: #{tpu_custom_call.1} parent=1 // pred_region
      %1539 = vsyncadd [#allocation3], 0
      %s1540 = sshll.u32 [#allocation2], 4
      %s1541 = int_to_ptr.vmem [resolvable:$true] %s1540
      %s1542 = sshll.u32 %s13, 4
      %s1543 = int_to_ptr.hbm [resolvable:$true] %s1542
      %1548 = dma.vmem_to_hbm [thread:$0]  %s1541, 256, %s1543, [#allocation3], 128, 128, 8
    $region57: #{tpu_custom_call.1} parent=1 // pred_fallthru
      _
    // Predicated region
    $region58: #{tpu_custom_call.1} parent=1 // pred_check
      _
    $region59: #{tpu_custom_call.1} parent=1 // pred_check_branch
      %1550 = sbr.rel (0) target = $region61
    $region60: #{tpu_custom_call.1} parent=1 // pred_region
      %1552 = vsyncadd [#allocation5], 0
      %s1554 = sshll.u32 [#allocation4], 4
      %s1555 = int_to_ptr.vmem [resolvable:$true] %s1554
      %s1556 = sshll.u32 %s14, 4
      %s1557 = int_to_ptr.hbm [resolvable:$true] %s1556
      %1559 = dma.vmem_to_hbm [thread:$0]  %s1555, 64, %s1557, [#allocation5]
    $region61: #{tpu_custom_call.1} parent=1 // pred_fallthru
      _
    // Predicated region
    $region62: #{tpu_custom_call.1} parent=1 // pred_check
      _
    $region63: #{tpu_custom_call.1} parent=1 // pred_check_branch
      %1561 = sbr.rel (0) target = $region65
    $region64: #{tpu_custom_call.1} parent=1 // pred_region
      %1563 = dma.done [#allocation3], 256
    $region65: #{tpu_custom_call.1} parent=1 // pred_fallthru
      _
    // Predicated region
    $region66: #{tpu_custom_call.1} parent=1 // pred_check
      _
    $region67: #{tpu_custom_call.1} parent=1 // pred_check_branch
      %1565 = sbr.rel (0) target = $region69
    $region68: #{tpu_custom_call.1} parent=1 // pred_region
      %1567 = dma.done [#allocation5], 64
    $region69: #{tpu_custom_call.1} parent=1 // pred_fallthru
      _
    %1568 = vsyncpa [#allocation3], 1
    %1569 = vsyncpa [#allocation5], 1

</llo_original>
